<compile_context>
chip_gen: v7x
topology: tpu7x:2x2x1
jax: 0.10.0
libtpu: 0.0.40
codegen_flags: <defaults>
</compile_context>

<pallas_src>
import jax
import jax.numpy as jnp
from jax.experimental import pallas as pl
from jax.experimental.pallas import tpu as pltpu

LANE = 128   # TPU lane width (pad feature dims to this)
TN = 128     # node-tile rows
TE = 256     # edge-tile rows
VMEM_LIMIT = 32 * 1024 * 1024  # safe on v5e (raises 16MiB default) and under v7x's 64MiB


def _round_up(x, m):
    return ((x + m - 1) // m) * m


# ---------------------------------------------------------------------------
# Kernel 1: per-edge messages.  concat+Linear split into two matmuls:
#   cat([a, b]) @ W.T == a @ Wa.T + b @ Wb.T
# ---------------------------------------------------------------------------
def _message_kernel(h_src_ref, ef_ref, wmn_ref, wme_ref, bm_ref, m_ref):
    m = (jnp.dot(h_src_ref[...], wmn_ref[...], preferred_element_type=jnp.float32)
         + jnp.dot(ef_ref[...], wme_ref[...], preferred_element_type=jnp.float32)
         + bm_ref[...])
    m_ref[...] = m.astype(m_ref.dtype)


# ---------------------------------------------------------------------------
# Kernel 2: mean aggregation over incoming edges + apply (relu(W_apply(...))).
# grid = (node tiles, edge tiles); the edge axis is the reduction axis.
# ---------------------------------------------------------------------------
def _agg_apply_kernel(dst_ref, m_ref, h_ref, invdeg_ref,
                      was_ref, wan_ref, ba_ref, out_ref, acc_ref):
    i = pl.program_id(0)
    k = pl.program_id(1)

    @pl.when(k == 0)
    def _():
        acc_ref[...] = jnp.zeros_like(acc_ref)

    tn = acc_ref.shape[0]
    te = dst_ref.shape[1]
    # Build the (node == dst) one-hot tile in registers: [TN, TE].
    node_ids = i * tn + jax.lax.broadcasted_iota(jnp.int32, (tn, te), 0)
    onehot = (node_ids == dst_ref[...]).astype(jnp.float32)
    acc_ref[...] += jnp.dot(onehot, m_ref[...], preferred_element_type=jnp.float32)

    @pl.when(k == pl.num_programs(1) - 1)
    def _():
        h_neigh = acc_ref[...] * invdeg_ref[...]   # mean; 0 for in-degree-0 nodes
        z = (jnp.dot(h_ref[...], was_ref[...], preferred_element_type=jnp.float32)
             + jnp.dot(h_neigh, wan_ref[...], preferred_element_type=jnp.float32)
             + ba_ref[...])
        out_ref[...] = jnp.maximum(z, 0.0).astype(out_ref.dtype)


def sage_layer_forward(h_nodes, ef, src, dst, p):
    """One SAGELayer.  h_nodes: [N, din] f32, ef: [E, de] f32, src/dst: [E] int32."""
    N, din = h_nodes.shape
    E, de = ef.shape
    dout = p["b_apply"].shape[-1]

    din_p, de_p, dout_p = _round_up(din, LANE), _round_up(de, LANE), _round_up(dout, LANE)
    n_pad, e_pad = _round_up(N, TN), _round_up(E, TE)

    # Glue (XLA): per-edge source-feature gather + zero-padding to tile/lane multiples.
    h_src = h_nodes[src]                                                    # [E, din]
    h_src_p = jnp.zeros((e_pad, din_p), jnp.float32).at[:E, :din].set(h_src)
    ef_p = jnp.zeros((e_pad, de_p), jnp.float32).at[:E, :de].set(ef)
    h_p = jnp.zeros((n_pad, din_p), jnp.float32).at[:N, :din].set(h_nodes)
    # Padded edges get dst = -1 -> never match any node id -> contribute nothing.
    dst_p = jnp.full((1, e_pad), -1, jnp.int32).at[0, :E].set(dst.astype(jnp.int32))

    deg = jnp.zeros((n_pad,), jnp.float32).at[dst].add(1.0)
    inv_deg = jnp.where(deg > 0, 1.0 / deg, 0.0).reshape(n_pad, 1)

    wmn = jnp.zeros((din_p, dout_p), jnp.float32).at[:din, :dout].set(p["Wm_n"])
    wme = jnp.zeros((de_p, dout_p), jnp.float32).at[:de, :dout].set(p["Wm_e"])
    bm = jnp.zeros((1, dout_p), jnp.float32).at[:, :dout].set(p["b_msg"])
    was = jnp.zeros((din_p, dout_p), jnp.float32).at[:din, :dout].set(p["Wa_s"])
    wan = jnp.zeros((dout_p, dout_p), jnp.float32).at[:dout, :dout].set(p["Wa_n"])
    ba = jnp.zeros((1, dout_p), jnp.float32).at[:, :dout].set(p["b_apply"])

    # --- Stage 1: messages, computed once over all edges ---------------------
    m = pl.pallas_call(
        _message_kernel,
        out_shape=jax.ShapeDtypeStruct((e_pad, dout_p), jnp.float32),
        grid_spec=pltpu.PrefetchScalarGridSpec(
            num_scalar_prefetch=0,
            grid=(e_pad // TE,),
            in_specs=[
                pl.BlockSpec((TE, din_p), lambda e: (e, 0)),
                pl.BlockSpec((TE, de_p), lambda e: (e, 0)),
                pl.BlockSpec((din_p, dout_p), lambda e: (0, 0)),   # weights stay resident
                pl.BlockSpec((de_p, dout_p), lambda e: (0, 0)),
                pl.BlockSpec((1, dout_p), lambda e: (0, 0)),
            ],
            out_specs=pl.BlockSpec((TE, dout_p), lambda e: (e, 0)),
        ),
        compiler_params=pltpu.CompilerParams(
            dimension_semantics=("parallel",),
            vmem_limit_bytes=VMEM_LIMIT,
        ),
    )(h_src_p, ef_p, wmn, wme, bm)

    # --- Stage 2: mean aggregation + apply ------------------------------------
    out_p = pl.pallas_call(
        _agg_apply_kernel,
        out_shape=jax.ShapeDtypeStruct((n_pad, dout_p), jnp.float32),
        grid_spec=pltpu.PrefetchScalarGridSpec(
            num_scalar_prefetch=0,
            grid=(n_pad // TN, e_pad // TE),
            in_specs=[
                pl.BlockSpec((1, TE), lambda i, k: (0, k)),           # dst ids
                pl.BlockSpec((TE, dout_p), lambda i, k: (k, 0)),      # messages
                pl.BlockSpec((TN, din_p), lambda i, k: (i, 0)),       # node feats
                pl.BlockSpec((TN, 1), lambda i, k: (i, 0)),           # 1/deg
                pl.BlockSpec((din_p, dout_p), lambda i, k: (0, 0)),   # Wa_s (resident)
                pl.BlockSpec((dout_p, dout_p), lambda i, k: (0, 0)),  # Wa_n (resident)
                pl.BlockSpec((1, dout_p), lambda i, k: (0, 0)),       # b_apply (resident)
            ],
            out_specs=pl.BlockSpec((TN, dout_p), lambda i, k: (i, 0)),
            scratch_shapes=[pltpu.VMEM((TN, dout_p), jnp.float32)],
        ),
        compiler_params=pltpu.CompilerParams(
            dimension_semantics=("parallel", "arbitrary"),
            vmem_limit_bytes=VMEM_LIMIT,
        ),
    )(dst_p, m, h_p, inv_deg, was, wan, ba)

    return out_p[:N, :dout]


@jax.jit
def sage_forward(nfeats, efeats, src, dst, params):
    """Full SAGE.forward: layer0 -> (dropout) -> layer1 -> sum over dim 1."""
    N = nfeats.shape[0]
    E = efeats.shape[0]
    h = nfeats.reshape(N, -1).astype(jnp.float32)
    ef = efeats.reshape(E, -1).astype(jnp.float32)
    h = sage_layer_forward(h, ef, src, dst, params["layer0"])
    # TODO(synk): nn.Dropout between layers is identity in inference mode; training-mode
    # stochastic dropout (pltpu.prng_*) is not implemented here.
    h = sage_layer_forward(h, ef, src, dst, params["layer1"])
    # SAGE.forward returns nfeats.sum(1); with the [N, 1, D] layout this squeezes dim 1.
    return h


# ---------------------------------------------------------------------------
# Parameter init (nn.Linear-style U(-1/sqrt(fan_in), 1/sqrt(fan_in))), with the
# concat weight pre-split and pre-transposed for x @ W.T.
# ---------------------------------------------------------------------------
def _init_linear(key, fan_in, fan_out):
    k1, k2 = jax.random.split(key)
    bound = 1.0 / jnp.sqrt(fan_in)
    w = jax.random.uniform(k1, (fan_out, fan_in), jnp.float32, -bound, bound)
    b = jax.random.uniform(k2, (1, fan_out), jnp.float32, -bound, bound)
    return w, b


def init_sage_layer_params(key, ndim_in, edims, ndim_out):
    k1, k2 = jax.random.split(key)
    w_msg, b_msg = _init_linear(k1, ndim_in + edims, ndim_out)
    w_app, b_app = _init_linear(k2, ndim_in + ndim_out, ndim_out)
    return {
        "Wm_n": w_msg[:, :ndim_in].T,    # [din,  dout]
        "Wm_e": w_msg[:, ndim_in:].T,    # [de,   dout]
        "b_msg": b_msg,                  # [1,    dout]
        "Wa_s": w_app[:, :ndim_in].T,    # [din,  dout]
        "Wa_n": w_app[:, ndim_in:].T,    # [dout, dout]
        "b_apply": b_app,                # [1,    dout]
    }


def init_sage_params(key, ndim_in, ndim_out, edim, hidden=128):
    k1, k2 = jax.random.split(key)
    return {
        "layer0": init_sage_layer_params(k1, ndim_in, edim, hidden),
        "layer1": init_sage_layer_params(k2, hidden, edim, ndim_out),
    }


# ---------------------------------------------------------------------------
# Pure-JAX reference for correctness checking.
# ---------------------------------------------------------------------------
def _layer_ref(h, ef, src, dst, p):
    N = h.shape[0]
    m = h[src] @ p["Wm_n"] + ef @ p["Wm_e"] + p["b_msg"]
    summed = jnp.zeros((N, m.shape[-1]), jnp.float32).at[dst].add(m)
    deg = jnp.zeros((N,), jnp.float32).at[dst].add(1.0)
    h_neigh = summed / jnp.maximum(deg, 1.0)[:, None]
    z = h @ p["Wa_s"] + h_neigh @ p["Wa_n"] + p["b_apply"]
    return jnp.maximum(z, 0.0)


def sage_reference(nfeats, efeats, src, dst, params):
    N, E = nfeats.shape[0], efeats.shape[0]
    h = nfeats.reshape(N, -1).astype(jnp.float32)
    ef = efeats.reshape(E, -1).astype(jnp.float32)
    h = _layer_ref(h, ef, src, dst, params["layer0"])
    h = _layer_ref(h, ef, src, dst, params["layer1"])
    return h


if __name__ == "__main__":
    # Small graph: 64 nodes, 512 edges; ndim_in=32, edim=16, hidden=128, ndim_out=64.
    N, E = 64, 512
    ndim_in, edim, ndim_out = 32, 16, 64

    key = jax.random.PRNGKey(0)
    k_n, k_e, k_s, k_d, k_p = jax.random.split(key, 5)

    nfeats = jax.random.normal(k_n, (N, 1, ndim_in), jnp.float32)
    efeats = jax.random.normal(k_e, (E, 1, edim), jnp.float32)
    src = jax.random.randint(k_s, (E,), 0, N, dtype=jnp.int32)
    dst = jax.random.randint(k_d, (E,), 0, N, dtype=jnp.int32)

    params = init_sage_params(k_p, ndim_in, ndim_out, edim)

    out = jax.block_until_ready(sage_forward(nfeats, efeats, src, dst, params))
    ref = sage_reference(nfeats, efeats, src, dst, params)

    assert out.shape == (N, ndim_out), f"bad output shape {out.shape}"
    max_err = float(jnp.max(jnp.abs(out - ref)))
    assert jnp.allclose(out, ref, atol=2e-3, rtol=2e-3), f"mismatch vs reference (max abs err {max_err})"

    print("KERNEL_OK")
</pallas_src>

<mosaic_0001>
module attributes {stable_mosaic.version = 11 : i64} {
  func.func private @main(%arg0: i32) attributes {dimension_semantics = [#tpu.dimension_semantics<core_parallel>], iteration_bounds = array<i64: 2>, tpu.core_type = #tpu.core_type<sc_scalar_subcore>, window_params = []} {
    return
  }
}

module attributes {stable_mosaic.version = 11 : i64} {
  func.func private @main(%arg0: i32) attributes {dimension_semantics = [#tpu.dimension_semantics<core_parallel>], iteration_bounds = array<i64: 2>, tpu.core_type = #tpu.core_type<sc_scalar_subcore>, window_params = []} {
    return
  }
}

module attributes {stable_mosaic.version = 11 : i64} {
  func.func @_message_kernel(%arg0: i32, %arg1: memref<256x128xf32, #tpu.memory_space<vmem>>, %arg2: memref<256x128xf32, #tpu.memory_space<vmem>>, %arg3: memref<128x128xf32, #tpu.memory_space<vmem>>, %arg4: memref<128x128xf32, #tpu.memory_space<vmem>>, %arg5: memref<1x128xf32, #tpu.memory_space<vmem>>, %arg6: memref<256x128xf32, #tpu.memory_space<vmem>>) attributes {dimension_semantics = [#tpu.dimension_semantics<parallel>], iteration_bounds = array<i64: 2>, scalar_prefetch = 0 : i64, scratch_operands = 0 : i64, tpu.core_type = #tpu.core_type<tc>, window_params = [{transform_indices = @transform_0, window_bounds = array<i64: 256, 128>}, {transform_indices = @transform_1, window_bounds = array<i64: 256, 128>}, {pipeline_mode = #tpu.pipeline_mode<synchronous>, transform_indices = @transform_2, window_bounds = array<i64: 128, 128>}, {pipeline_mode = #tpu.pipeline_mode<synchronous>, transform_indices = @transform_3, window_bounds = array<i64: 128, 128>}, {pipeline_mode = #tpu.pipeline_mode<synchronous>, transform_indices = @transform_4, window_bounds = array<i64: 1, 128>}, {transform_indices = @transform_5, window_bounds = array<i64: 256, 128>}]} {
    %c0 = arith.constant 0 : index
    %c0_0 = arith.constant 0 : index
    %0 = vector.load %arg1[%c0, %c0_0] : memref<256x128xf32, #tpu.memory_space<vmem>>, vector<256x128xf32>
    %c0_1 = arith.constant 0 : index
    %c0_2 = arith.constant 0 : index
    %1 = vector.load %arg3[%c0_1, %c0_2] : memref<128x128xf32, #tpu.memory_space<vmem>>, vector<128x128xf32>
    %cst = arith.constant dense<0.000000e+00> : vector<256x128xf32>
    %2 = tpu.matmul %0, %1, %cst {dimension_numbers = #tpu.dot_dimension_numbers<[1], [0], [0], [1], [0, 0, 1, 1], [], []>} : vector<256x128xf32>, vector<128x128xf32>, vector<256x128xf32> -> vector<256x128xf32>
    %c0_3 = arith.constant 0 : index
    %c0_4 = arith.constant 0 : index
    %3 = vector.load %arg2[%c0_3, %c0_4] : memref<256x128xf32, #tpu.memory_space<vmem>>, vector<256x128xf32>
    %c0_5 = arith.constant 0 : index
    %c0_6 = arith.constant 0 : index
    %4 = vector.load %arg4[%c0_5, %c0_6] : memref<128x128xf32, #tpu.memory_space<vmem>>, vector<128x128xf32>
    %cst_7 = arith.constant dense<0.000000e+00> : vector<256x128xf32>
    %5 = tpu.matmul %3, %4, %cst_7 {dimension_numbers = #tpu.dot_dimension_numbers<[1], [0], [0], [1], [0, 0, 1, 1], [], []>} : vector<256x128xf32>, vector<128x128xf32>, vector<256x128xf32> -> vector<256x128xf32>
    %6 = arith.addf %2, %5 : vector<256x128xf32>
    %c0_8 = arith.constant 0 : index
    %c0_9 = arith.constant 0 : index
    %7 = vector.load %arg5[%c0_8, %c0_9] : memref<1x128xf32, #tpu.memory_space<vmem>>, vector<1x128xf32>
    %8 = vector.broadcast %7 : vector<1x128xf32> to vector<256x128xf32>
    %9 = arith.addf %6, %8 : vector<256x128xf32>
    %c0_10 = arith.constant 0 : index
    %c0_11 = arith.constant 0 : index
    %10 = vector.load %arg6[%c0_10, %c0_11] : memref<256x128xf32, #tpu.memory_space<vmem>>, vector<256x128xf32>
    tpu.vector_store %arg6[%c0_10, %c0_11], %9 {strides = array<i32>} : memref<256x128xf32, #tpu.memory_space<vmem>>, vector<256x128xf32>,
    return
  }
  func.func @transform_0(%arg0: i32) -> (i32, i32) {
    %c0_i32 = arith.constant 0 : i32
    %c0_i32_0 = arith.constant 0 : i32
    return %arg0, %c0_i32 : i32, i32
  }
  func.func @transform_1(%arg0: i32) -> (i32, i32) {
    %c0_i32 = arith.constant 0 : i32
    %c0_i32_0 = arith.constant 0 : i32
    return %arg0, %c0_i32 : i32, i32
  }
  func.func @transform_2(%arg0: i32) -> (i32, i32) {
    %c0_i32 = arith.constant 0 : i32
    %c0_i32_0 = arith.constant 0 : i32
    %c0_i32_1 = arith.constant 0 : i32
    return %c0_i32, %c0_i32_0 : i32, i32
  }
  func.func @transform_3(%arg0: i32) -> (i32, i32) {
    %c0_i32 = arith.constant 0 : i32
    %c0_i32_0 = arith.constant 0 : i32
    %c0_i32_1 = arith.constant 0 : i32
    return %c0_i32, %c0_i32_0 : i32, i32
  }
  func.func @transform_4(%arg0: i32) -> (i32, i32) {
    %c0_i32 = arith.constant 0 : i32
    %c0_i32_0 = arith.constant 0 : i32
    %c0_i32_1 = arith.constant 0 : i32
    return %c0_i32, %c0_i32_0 : i32, i32
  }
  func.func @transform_5(%arg0: i32) -> (i32, i32) {
    %c0_i32 = arith.constant 0 : i32
    %c0_i32_0 = arith.constant 0 : i32
    return %arg0, %c0_i32 : i32, i32
  }
}

module attributes {stable_mosaic.version = 11 : i64} {
  func.func @_agg_apply_kernel(%arg0: i32, %arg1: i32, %arg2: memref<1x256xi32, #tpu.memory_space<vmem>>, %arg3: memref<256x128xf32, #tpu.memory_space<vmem>>, %arg4: memref<128x128xf32, #tpu.memory_space<vmem>>, %arg5: memref<128x1xf32, #tpu.memory_space<vmem>>, %arg6: memref<128x128xf32, #tpu.memory_space<vmem>>, %arg7: memref<128x128xf32, #tpu.memory_space<vmem>>, %arg8: memref<1x128xf32, #tpu.memory_space<vmem>>, %arg9: memref<128x128xf32, #tpu.memory_space<vmem>>, %arg10: memref<128x128xf32, #tpu.memory_space<vmem>>) attributes {dimension_semantics = [#tpu.dimension_semantics<parallel>, #tpu.dimension_semantics<arbitrary>], iteration_bounds = array<i64: 1, 2>, scalar_prefetch = 0 : i64, scratch_operands = 1 : i64, tpu.core_type = #tpu.core_type<tc>, window_params = [{transform_indices = @transform_0, window_bounds = array<i64: 1, 256>}, {transform_indices = @transform_1, window_bounds = array<i64: 256, 128>}, {transform_indices = @transform_2, window_bounds = array<i64: 128, 128>}, {transform_indices = @transform_3, window_bounds = array<i64: 128, 1>}, {pipeline_mode = #tpu.pipeline_mode<synchronous>, transform_indices = @transform_4, window_bounds = array<i64: 128, 128>}, {pipeline_mode = #tpu.pipeline_mode<synchronous>, transform_indices = @transform_5, window_bounds = array<i64: 128, 128>}, {pipeline_mode = #tpu.pipeline_mode<synchronous>, transform_indices = @transform_6, window_bounds = array<i64: 1, 128>}, {transform_indices = @transform_7, window_bounds = array<i64: 128, 128>}]} {
    %c0_i32 = arith.constant 0 : i32
    %0 = arith.cmpi eq, %arg1, %c0_i32 : i32
    %1 = arith.extui %0 : i1 to i32
    %c0_i32_0 = arith.constant 0 : i32
    %2 = arith.cmpi ne, %1, %c0_i32_0 : i32
    scf.if %2 {
      %cst_9 = arith.constant 0.000000e+00 : f32
      %20 = vector.broadcast %cst_9 : f32 to vector<128x128xf32>
      %c0_10 = arith.constant 0 : index
      %c0_11 = arith.constant 0 : index
      %21 = vector.load %arg10[%c0_10, %c0_11] : memref<128x128xf32, #tpu.memory_space<vmem>>, vector<128x128xf32>
      tpu.vector_store %arg10[%c0_10, %c0_11], %20 {strides = array<i32>} : memref<128x128xf32, #tpu.memory_space<vmem>>, vector<128x128xf32>,
    } else {
    }
    %c128_i32 = arith.constant 128 : i32
    %3 = arith.muli %arg0, %c128_i32 : i32
    %4 = tpu.iota {dimensions = array<i32: 0>} : vector<128x256xi32>
    %5 = vector.broadcast %3 : i32 to vector<128x256xi32>
    %6 = arith.addi %5, %4 : vector<128x256xi32>
    %c0 = arith.constant 0 : index
    %c0_1 = arith.constant 0 : index
    %7 = vector.load %arg2[%c0, %c0_1] : memref<1x256xi32, #tpu.memory_space<vmem>>, vector<1x256xi32>
    %8 = vector.broadcast %7 : vector<1x256xi32> to vector<128x256xi32>
    %9 = arith.cmpi eq, %6, %8 : vector<128x256xi32>
    %10 = arith.extui %9 : vector<128x256xi1> to vector<128x256xi32>
    %11 = arith.sitofp %10 : vector<128x256xi32> to vector<128x256xf32>
    %c0_2 = arith.constant 0 : index
    %c0_3 = arith.constant 0 : index
    %12 = vector.load %arg10[%c0_2, %c0_3] : memref<128x128xf32, #tpu.memory_space<vmem>>, vector<128x128xf32>
    %c0_4 = arith.constant 0 : index
    %c0_5 = arith.constant 0 : index
    %13 = vector.load %arg3[%c0_4, %c0_5] : memref<256x128xf32, #tpu.memory_space<vmem>>, vector<256x128xf32>
    %cst = arith.constant dense<0.000000e+00> : vector<128x128xf32>
    %14 = tpu.matmul %11, %13, %cst {dimension_numbers = #tpu.dot_dimension_numbers<[1], [0], [0], [1], [0, 0, 1, 1], [], []>} : vector<128x256xf32>, vector<256x128xf32>, vector<128x128xf32> -> vector<128x128xf32>
    %15 = arith.addf %12, %14 : vector<128x128xf32>
    %c0_6 = arith.constant 0 : index
    %c0_7 = arith.constant 0 : index
    %16 = vector.load %arg10[%c0_6, %c0_7] : memref<128x128xf32, #tpu.memory_space<vmem>>, vector<128x128xf32>
    tpu.vector_store %arg10[%c0_6, %c0_7], %15 {strides = array<i32>} : memref<128x128xf32, #tpu.memory_space<vmem>>, vector<128x128xf32>,
    %c1_i32 = arith.constant 1 : i32
    %17 = arith.cmpi eq, %arg1, %c1_i32 : i32
    %18 = arith.extui %17 : i1 to i32
    %c0_i32_8 = arith.constant 0 : i32
    %19 = arith.cmpi ne, %18, %c0_i32_8 : i32
    scf.if %19 {
      %c0_9 = arith.constant 0 : index
      %c0_10 = arith.constant 0 : index
      %20 = vector.load %arg10[%c0_9, %c0_10] : memref<128x128xf32, #tpu.memory_space<vmem>>, vector<128x128xf32>
      %c0_11 = arith.constant 0 : index
      %c0_12 = arith.constant 0 : index
      %21 = vector.load %arg5[%c0_11, %c0_12] : memref<128x1xf32, #tpu.memory_space<vmem>>, vector<128x1xf32>
      %22 = vector.broadcast %21 : vector<128x1xf32> to vector<128x128xf32>
      %23 = arith.mulf %20, %22 : vector<128x128xf32>
      %c0_13 = arith.constant 0 : index
      %c0_14 = arith.constant 0 : index
      %24 = vector.load %arg4[%c0_13, %c0_14] : memref<128x128xf32, #tpu.memory_space<vmem>>, vector<128x128xf32>
      %c0_15 = arith.constant 0 : index
      %c0_16 = arith.constant 0 : index
      %25 = vector.load %arg6[%c0_15, %c0_16] : memref<128x128xf32, #tpu.memory_space<vmem>>, vector<128x128xf32>
      %cst_17 = arith.constant dense<0.000000e+00> : vector<128x128xf32>
      %26 = tpu.matmul %24, %25, %cst_17 {dimension_numbers = #tpu.dot_dimension_numbers<[1], [0], [0], [1], [0, 0, 1, 1], [], []>} : vector<128x128xf32>, vector<128x128xf32>, vector<128x128xf32> -> vector<128x128xf32>
      %c0_18 = arith.constant 0 : index
      %c0_19 = arith.constant 0 : index
      %27 = vector.load %arg7[%c0_18, %c0_19] : memref<128x128xf32, #tpu.memory_space<vmem>>, vector<128x128xf32>
      %cst_20 = arith.constant dense<0.000000e+00> : vector<128x128xf32>
      %28 = tpu.matmul %23, %27, %cst_20 {dimension_numbers = #tpu.dot_dimension_numbers<[1], [0], [0], [1], [0, 0, 1, 1], [], []>} : vector<128x128xf32>, vector<128x128xf32>, vector<128x128xf32> -> vector<128x128xf32>
      %29 = arith.addf %26, %28 : vector<128x128xf32>
      %c0_21 = arith.constant 0 : index
      %c0_22 = arith.constant 0 : index
      %30 = vector.load %arg8[%c0_21, %c0_22] : memref<1x128xf32, #tpu.memory_space<vmem>>, vector<1x128xf32>
      %31 = vector.broadcast %30 : vector<1x128xf32> to vector<128x128xf32>
      %32 = arith.addf %29, %31 : vector<128x128xf32>
      %cst_23 = arith.constant 0.000000e+00 : f32
      %33 = vector.broadcast %cst_23 : f32 to vector<128x128xf32>
      %34 = arith.maximumf %32, %33 : vector<128x128xf32>
      %c0_24 = arith.constant 0 : index
      %c0_25 = arith.constant 0 : index
      %35 = vector.load %arg9[%c0_24, %c0_25] : memref<128x128xf32, #tpu.memory_space<vmem>>, vector<128x128xf32>
      tpu.vector_store %arg9[%c0_24, %c0_25], %34 {strides = array<i32>} : memref<128x128xf32, #tpu.memory_space<vmem>>, vector<128x128xf32>,
    } else {
    }
    return
  }
  func.func @transform_0(%arg0: i32, %arg1: i32) -> (i32, i32) {
    %c0_i32 = arith.constant 0 : i32
    %c0_i32_0 = arith.constant 0 : i32
    return %c0_i32, %arg1 : i32, i32
  }
  func.func @transform_1(%arg0: i32, %arg1: i32) -> (i32, i32) {
    %c0_i32 = arith.constant 0 : i32
    %c0_i32_0 = arith.constant 0 : i32
    return %arg1, %c0_i32 : i32, i32
  }
  func.func @transform_2(%arg0: i32, %arg1: i32) -> (i32, i32) {
    %c0_i32 = arith.constant 0 : i32
    %c0_i32_0 = arith.constant 0 : i32
    return %arg0, %c0_i32 : i32, i32
  }
  func.func @transform_3(%arg0: i32, %arg1: i32) -> (i32, i32) {
    %c0_i32 = arith.constant 0 : i32
    %c0_i32_0 = arith.constant 0 : i32
    return %arg0, %c0_i32 : i32, i32
  }
  func.func @transform_4(%arg0: i32, %arg1: i32) -> (i32, i32) {
    %c0_i32 = arith.constant 0 : i32
    %c0_i32_0 = arith.constant 0 : i32
    %c0_i32_1 = arith.constant 0 : i32
    return %c0_i32, %c0_i32_0 : i32, i32
  }
  func.func @transform_5(%arg0: i32, %arg1: i32) -> (i32, i32) {
    %c0_i32 = arith.constant 0 : i32
    %c0_i32_0 = arith.constant 0 : i32
    %c0_i32_1 = arith.constant 0 : i32
    return %c0_i32, %c0_i32_0 : i32, i32
  }
  func.func @transform_6(%arg0: i32, %arg1: i32) -> (i32, i32) {
    %c0_i32 = arith.constant 0 : i32
    %c0_i32_0 = arith.constant 0 : i32
    %c0_i32_1 = arith.constant 0 : i32
    return %c0_i32, %c0_i32_0 : i32, i32
  }
  func.func @transform_7(%arg0: i32, %arg1: i32) -> (i32, i32) {
    %c0_i32 = arith.constant 0 : i32
    %c0_i32_0 = arith.constant 0 : i32
    return %arg0, %c0_i32 : i32, i32
  }
}

</mosaic_0001>

<llo_original>
// kernel: sage_forward.4
$region0: #{sage_forward.4}
  #allocation0 [shape = 'u32[]', space=smem, size = 0x4, offset = 0x4, fixed_abs, tag = 'smem constant byte address 0x4 - core index']
  #allocation1 [shape = 'u32[144,128]{1,0:T(1,128)}', space=vmem, size = 0x12000, scoped, tag = 'internal scratch']
  %s0 = inlined_call_operand.vmem [shape: f32[512,128], index: 0, kind: input, shape index: {}]
  %s1 = inlined_call_operand.vmem [shape: f32[512,128], index: 1, kind: input, shape index: {}]
  %s2 = inlined_call_operand.vmem [shape: f32[128,128], index: 2, kind: input, shape index: {}]
  %s3 = inlined_call_operand.vmem [shape: f32[128,128], index: 3, kind: input, shape index: {}]
  %s4 = inlined_call_operand.vmem [shape: f32[1,128], index: 4, kind: input, shape index: {}]
  %s5 = inlined_call_operand.vmem [shape: f32[512,128], index: 5, kind: output, shape index: {}]
  %s6 = sld [smem:[#allocation0]]
  $region53: #{sage_forward.4} parent=0
    _
  %s8 = ssub.s32 1, %s6
  %s9 = scalar_select 0, %s8, %s6
  loop: start=0, step=1, limit=4
  $region2: #{sage_forward.4} parent=0 // loop_pre_header
    _
  $region3: #{sage_forward.4} parent=0 // loop_header
    %s11 = sphi 0, %s15
    %p12 = scmp.ge.s32.totalorder %s11, 4
    %s21 = sphi 0, %s23
    %s24 = sphi 0, %s21
    %s25 = sphi 0, %s24
    %s41 = sphi 0, %s25
    %s47 = sphi 0, %s49
    %s50 = sphi 0, %s47
    %s51 = sphi 0, %s50
    %s67 = sphi 0, %s51
    %s71 = sphi 0, %s71
    %s73 = sphi 0, %s71
    %s74 = sphi 0, %s73
    %s88 = sphi 0, %s74
    %s92 = sphi 0, %s92
    %s94 = sphi 0, %s92
    %s95 = sphi 0, %s94
    %s109 = sphi 0, %s95
    %s113 = sphi 0, %s113
    %s115 = sphi 0, %s113
    %s116 = sphi 0, %s115
    %s130 = sphi 0, %s116
    %s136 = sphi 0, %s138
    %s139 = sphi 0, %s136
    %s140 = sphi 0, %s139
    %s156 = sphi 0, %s140
  $region4: #{sage_forward.4} parent=0 // loop_header_branch
    %14 = sbr.rel (%p12) target = $region8
  $region5: #{sage_forward.4} parent=0 // loop_body
    %s16 = ssub.s32 %s11, 1
    %s17 = ssub.s32 %s11, 2
    %s18 = sadd.s32 %s11, 1
    %s19 = ssub.s32 %s11, %s18
    %p20 = scmp.eq.s32.totalorder %s19, 0
    %s22 = sadd.s32 %s21, 1
    %s23 = scalar_select %p20, %s21, %s22
    %p26 = pneg %p20
    %p27 = scmp.eq.s32.totalorder %s11, 1
    %p28 = por %p26, %p27
    %p29 = scmp.ne.s32.totalorder %s21, %s24
    %p30 = scmp.eq.s32.totalorder %s11, 0
    %p31 = por %p29, %p30
    %p32 = scmp.ne.s32.totalorder %s21, %s24
    %p33 = scmp.eq.s32.totalorder %s16, 1
    %p34 = por %p32, %p33
    %p35 = scmp.ne.s32.totalorder %s24, %s25
    %p36 = scmp.eq.s32.totalorder %s16, 0
    %p37 = por %p35, %p36
    %p38 = scmp.ne.s32.totalorder %s24, %s25
    %p39 = scmp.eq.s32.totalorder %s17, 1
    %p40 = por %p38, %p39
    %p42 = scmp.ne.s32.totalorder %s25, %s41
    %p43 = scmp.eq.s32.totalorder %s17, 0
    %p44 = por %p42, %p43
    %s45 = ssub.s32 %s11, %s18
    %p46 = scmp.eq.s32.totalorder %s45, 0
    %s48 = sadd.s32 %s47, 1
    %s49 = scalar_select %p46, %s47, %s48
    %p52 = pneg %p46
    %p53 = scmp.eq.s32.totalorder %s11, 1
    %p54 = por %p52, %p53
    %p55 = scmp.ne.s32.totalorder %s47, %s50
    %p56 = scmp.eq.s32.totalorder %s11, 0
    %p57 = por %p55, %p56
    %p58 = scmp.ne.s32.totalorder %s47, %s50
    %p59 = scmp.eq.s32.totalorder %s16, 1
    %p60 = por %p58, %p59
    %p61 = scmp.ne.s32.totalorder %s50, %s51
    %p62 = scmp.eq.s32.totalorder %s16, 0
    %p63 = por %p61, %p62
    %p64 = scmp.ne.s32.totalorder %s50, %s51
    %p65 = scmp.eq.s32.totalorder %s17, 1
    %p66 = por %p64, %p65
    %p68 = scmp.ne.s32.totalorder %s51, %s67
    %p69 = scmp.eq.s32.totalorder %s17, 0
    %p70 = por %p68, %p69
    %s72 = sadd.s32 %s71, 1
    %p75 = scmp.eq.s32.totalorder %s11, 1
    %p76 = scmp.ne.s32.totalorder %s71, %s73
    %p77 = scmp.eq.s32.totalorder %s11, 0
    %p78 = por %p76, %p77
    %p79 = scmp.ne.s32.totalorder %s71, %s73
    %p80 = scmp.eq.s32.totalorder %s16, 1
    %p81 = por %p79, %p80
    %p82 = scmp.ne.s32.totalorder %s73, %s74
    %p83 = scmp.eq.s32.totalorder %s16, 0
    %p84 = por %p82, %p83
    %p85 = scmp.ne.s32.totalorder %s73, %s74
    %p86 = scmp.eq.s32.totalorder %s17, 1
    %p87 = por %p85, %p86
    %p89 = scmp.ne.s32.totalorder %s74, %s88
    %p90 = scmp.eq.s32.totalorder %s17, 0
    %p91 = por %p89, %p90
    %s93 = sadd.s32 %s92, 1
    %p96 = scmp.eq.s32.totalorder %s11, 1
    %p97 = scmp.ne.s32.totalorder %s92, %s94
    %p98 = scmp.eq.s32.totalorder %s11, 0
    %p99 = por %p97, %p98
    %p100 = scmp.ne.s32.totalorder %s92, %s94
    %p101 = scmp.eq.s32.totalorder %s16, 1
    %p102 = por %p100, %p101
    %p103 = scmp.ne.s32.totalorder %s94, %s95
    %p104 = scmp.eq.s32.totalorder %s16, 0
    %p105 = por %p103, %p104
    %p106 = scmp.ne.s32.totalorder %s94, %s95
    %p107 = scmp.eq.s32.totalorder %s17, 1
    %p108 = por %p106, %p107
    %p110 = scmp.ne.s32.totalorder %s95, %s109
    %p111 = scmp.eq.s32.totalorder %s17, 0
    %p112 = por %p110, %p111
    %s114 = sadd.s32 %s113, 1
    %p117 = scmp.eq.s32.totalorder %s11, 1
    %p118 = scmp.ne.s32.totalorder %s113, %s115
    %p119 = scmp.eq.s32.totalorder %s11, 0
    %p120 = por %p118, %p119
    %p121 = scmp.ne.s32.totalorder %s113, %s115
    %p122 = scmp.eq.s32.totalorder %s16, 1
    %p123 = por %p121, %p122
    %p124 = scmp.ne.s32.totalorder %s115, %s116
    %p125 = scmp.eq.s32.totalorder %s16, 0
    %p126 = por %p124, %p125
    %p127 = scmp.ne.s32.totalorder %s115, %s116
    %p128 = scmp.eq.s32.totalorder %s17, 1
    %p129 = por %p127, %p128
    %p131 = scmp.ne.s32.totalorder %s116, %s130
    %p132 = scmp.eq.s32.totalorder %s17, 0
    %p133 = por %p131, %p132
    %s134 = ssub.s32 %s11, %s18
    %p135 = scmp.eq.s32.totalorder %s134, 0
    %s137 = sadd.s32 %s136, 1
    %s138 = scalar_select %p135, %s136, %s137
    %p141 = pneg %p135
    %p142 = scmp.eq.s32.totalorder %s11, 1
    %p143 = por %p141, %p142
    %p144 = scmp.ne.s32.totalorder %s136, %s139
    %p145 = scmp.eq.s32.totalorder %s11, 0
    %p146 = por %p144, %p145
    %p147 = scmp.ne.s32.totalorder %s136, %s139
    %p148 = scmp.eq.s32.totalorder %s16, 1
    %p149 = por %p147, %p148
    %p150 = scmp.ne.s32.totalorder %s139, %s140
    %p151 = scmp.eq.s32.totalorder %s16, 0
    %p152 = por %p150, %p151
    %p153 = scmp.ne.s32.totalorder %s139, %s140
    %p154 = scmp.eq.s32.totalorder %s17, 1
    %p155 = por %p153, %p154
    %p157 = scmp.ne.s32.totalorder %s140, %s156
    %p158 = scmp.eq.s32.totalorder %s17, 0
    %p159 = por %p157, %p158
    %p160 = scmp.le.s32.totalorder 1, %s11
    %p161 = scmp.lt.s32.totalorder %s11, 3
    %p162 = pnand %p160, %p161
    %p163 = pneg %p162
    // Predicated region
    $region9: #{sage_forward.4} parent=5 // pred_check
      _
    $region10: #{sage_forward.4} parent=5 // pred_check_branch
      %165 = sbr.rel (%p162) target = $region12
    $region11: #{sage_forward.4} parent=5 // pred_region
      %s166 = ssub.s32 %s11, 1
      // Predicated region
      $region13: #{sage_forward.4} parent=11 // pred_check
        %p167 = pneg %p84
      $region14: #{sage_forward.4} parent=11 // pred_check_branch
        %169 = sbr.rel (%p167) target = $region16
      $region15: #{sage_forward.4} parent=11 // pred_region
        _
      $region16: #{sage_forward.4} parent=11 // pred_fallthru
        _
      // Predicated region
      $region17: #{sage_forward.4} parent=11 // pred_check
        %p170 = pneg %p105
      $region18: #{sage_forward.4} parent=11 // pred_check_branch
        %172 = sbr.rel (%p170) target = $region20
      $region19: #{sage_forward.4} parent=11 // pred_region
        _
      $region20: #{sage_forward.4} parent=11 // pred_fallthru
        _
      // Predicated region
      $region21: #{sage_forward.4} parent=11 // pred_check
        %p173 = pneg %p126
      $region22: #{sage_forward.4} parent=11 // pred_check_branch
        %175 = sbr.rel (%p173) target = $region24
      $region23: #{sage_forward.4} parent=11 // pred_region
        _
      $region24: #{sage_forward.4} parent=11 // pred_fallthru
        _
    $region12: #{sage_forward.4} parent=5 // pred_fallthru
      _
    %p176 = scmp.lt.s32.totalorder %s11, 2
    // Predicated region
    $region25: #{sage_forward.4} parent=5 // pred_check
      %p177 = pneg %p176
    $region26: #{sage_forward.4} parent=5 // pred_check_branch
      %179 = sbr.rel (%p177) target = $region28
    $region27: #{sage_forward.4} parent=5 // pred_region
      // Predicated region
      $region29: #{sage_forward.4} parent=27 // pred_check
        %p180 = pneg %p31
      $region30: #{sage_forward.4} parent=27 // pred_check_branch
        %182 = sbr.rel (%p180) target = $region32
      $region31: #{sage_forward.4} parent=27 // pred_region
        %s183 = smul.u32 32, %s11
        %p184 = scmp.lt.s32.totalorder %s183, 63
        %s185 = scalar_select %p184, %s183, 63
        %s186 = smul.addr %s185, 8
        %s187 = scalar_lea.vmem %s0, %s186
        %s188 = smul.u32 32, %s11
      $region32: #{sage_forward.4} parent=27 // pred_fallthru
        _
      // Predicated region
      $region33: #{sage_forward.4} parent=27 // pred_check
        %p189 = pneg %p57
      $region34: #{sage_forward.4} parent=27 // pred_check_branch
        %191 = sbr.rel (%p189) target = $region36
      $region35: #{sage_forward.4} parent=27 // pred_region
        %s192 = smul.u32 32, %s11
        %p193 = scmp.lt.s32.totalorder %s192, 63
        %s194 = scalar_select %p193, %s192, 63
        %s195 = smul.addr %s194, 8
        %s196 = scalar_lea.vmem %s1, %s195
        %s197 = smul.u32 32, %s11
      $region36: #{sage_forward.4} parent=27 // pred_fallthru
        _
    $region28: #{sage_forward.4} parent=5 // pred_fallthru
      _
    %p198 = scmp.le.s32.totalorder 1, %s11
    %p199 = scmp.lt.s32.totalorder %s11, 3
    %p200 = pnand %p198, %p199
    %p201 = pneg %p200
    // Predicated region
    $region37: #{sage_forward.4} parent=5 // pred_check
      _
    $region38: #{sage_forward.4} parent=5 // pred_check_branch
      %203 = sbr.rel (%p200) target = $region40
    $region39: #{sage_forward.4} parent=5 // pred_region
      %s204 = ssub.s32 %s11, 1
      %s205 = smul.u32 32, %s16
      %p206 = scmp.lt.s32.totalorder %s205, 63
      %s207 = scalar_select %p206, %s205, 63
      %s208 = smul.addr %s207, 8
      %s209 = scalar_lea.vmem %s0, %s208
      %p210 = pneg %p37
      %p211 = pneg %p34
      %s212 = smul.u32 32, %s16
      %p213 = scmp.lt.s32.totalorder %s212, 63
      %s214 = scalar_select %p213, %s212, 63
      %s215 = smul.addr %s214, 8
      %s216 = scalar_lea.vmem %s1, %s215
      %p217 = pneg %p63
      %p218 = pneg %p60
      %p219 = pneg %p84
      %p220 = pneg %p81
      %p221 = pneg %p105
      %p222 = pneg %p102
      %p223 = pneg %p126
      %p224 = pneg %p123
      %p225 = pneg %p152
      %p226 = pneg %p149
      %s227 = smul.u32 32, %s16
      %p228 = scmp.lt.s32.totalorder %s227, 63
      %s229 = scalar_select %p228, %s227, 63
      %s230 = smul.addr %s229, 8
      %s231 = scalar_lea.vmem %s5, %s230
      %s232 = smul.u32 32, %s16
      %p233 = scmp.lt.s32.totalorder %s232, 63
      %s234 = scalar_select %p233, %s232, 63
      %s235 = smul.addr %s234, 8
      %s236 = scalar_lea.vmem %s0, %s235
      %s237 = smul.u32 32, %s16
      %s238 = smul.u32 32, %s16
      %p239 = scmp.lt.s32.totalorder %s238, 63
      %s240 = scalar_select %p239, %s238, 63
      %s241 = smul.addr %s240, 8
      %s242 = scalar_lea.vmem %s1, %s241
      %s243 = smul.u32 32, %s16
      %s244 = smul.u32 32, %s16
      %p245 = scmp.lt.s32.totalorder %s244, 63
      %s246 = scalar_select %p245, %s244, 63
      %s247 = smul.addr %s246, 8
      %s248 = scalar_lea.vmem %s5, %s247
      %s249 = smul.u32 32, %s16
      %v250 = vld [vmem:[%s236] sm:$0xff]
      %v251 = vld [vmem:[%s236 + $0x8] sm:$0xff]
      %v252 = vld [vmem:[%s236 + $0x10] sm:$0xff]
      %v253 = vld [vmem:[%s236 + $0x18] sm:$0xff]
      %v254 = vld [vmem:[%s236 + $0x20] sm:$0xff]
      %v255 = vld [vmem:[%s236 + $0x28] sm:$0xff]
      %v256 = vld [vmem:[%s236 + $0x30] sm:$0xff]
      %v257 = vld [vmem:[%s236 + $0x38] sm:$0xff]
      %v258 = vld [vmem:[%s236 + $0x40] sm:$0xff]
      %v259 = vld [vmem:[%s236 + $0x48] sm:$0xff]
      %v260 = vld [vmem:[%s236 + $0x50] sm:$0xff]
      %v261 = vld [vmem:[%s236 + $0x58] sm:$0xff]
      %v262 = vld [vmem:[%s236 + $0x60] sm:$0xff]
      %v263 = vld [vmem:[%s236 + $0x68] sm:$0xff]
      %v264 = vld [vmem:[%s236 + $0x70] sm:$0xff]
      %v265 = vld [vmem:[%s236 + $0x78] sm:$0xff]
      %v266 = vld [vmem:[%s236 + $0x80] sm:$0xff]
      %v267 = vld [vmem:[%s236 + $0x88] sm:$0xff]
      %v268 = vld [vmem:[%s236 + $0x90] sm:$0xff]
      %v269 = vld [vmem:[%s236 + $0x98] sm:$0xff]
      %v270 = vld [vmem:[%s236 + $0xa0] sm:$0xff]
      %v271 = vld [vmem:[%s236 + $0xa8] sm:$0xff]
      %v272 = vld [vmem:[%s236 + $0xb0] sm:$0xff]
      %v273 = vld [vmem:[%s236 + $0xb8] sm:$0xff]
      %v274 = vld [vmem:[%s236 + $0xc0] sm:$0xff]
      %v275 = vld [vmem:[%s236 + $0xc8] sm:$0xff]
      %v276 = vld [vmem:[%s236 + $0xd0] sm:$0xff]
      %v277 = vld [vmem:[%s236 + $0xd8] sm:$0xff]
      %v278 = vld [vmem:[%s236 + $0xe0] sm:$0xff]
      %v279 = vld [vmem:[%s236 + $0xe8] sm:$0xff]
      %v280 = vld [vmem:[%s236 + $0xf0] sm:$0xff]
      %v281 = vld [vmem:[%s236 + $0xf8] sm:$0xff]
      %v282 = vld [vmem:[%s2] sm:$0xff]
      %v283 = vld [vmem:[%s2 + $0x8] sm:$0xff]
      %v284 = vld [vmem:[%s2 + $0x10] sm:$0xff]
      %v285 = vld [vmem:[%s2 + $0x18] sm:$0xff]
      %v286 = vld [vmem:[%s2 + $0x20] sm:$0xff]
      %v287 = vld [vmem:[%s2 + $0x28] sm:$0xff]
      %v288 = vld [vmem:[%s2 + $0x30] sm:$0xff]
      %v289 = vld [vmem:[%s2 + $0x38] sm:$0xff]
      %v290 = vld [vmem:[%s2 + $0x40] sm:$0xff]
      %v291 = vld [vmem:[%s2 + $0x48] sm:$0xff]
      %v292 = vld [vmem:[%s2 + $0x50] sm:$0xff]
      %v293 = vld [vmem:[%s2 + $0x58] sm:$0xff]
      %v294 = vld [vmem:[%s2 + $0x60] sm:$0xff]
      %v295 = vld [vmem:[%s2 + $0x68] sm:$0xff]
      %v296 = vld [vmem:[%s2 + $0x70] sm:$0xff]
      %v297 = vld [vmem:[%s2 + $0x78] sm:$0xff]
      %v298 = vld [vmem:[%s242] sm:$0xff]
      %v299 = vld [vmem:[%s242 + $0x8] sm:$0xff]
      %v300 = vld [vmem:[%s242 + $0x10] sm:$0xff]
      %v301 = vld [vmem:[%s242 + $0x18] sm:$0xff]
      %v302 = vld [vmem:[%s242 + $0x20] sm:$0xff]
      %v303 = vld [vmem:[%s242 + $0x28] sm:$0xff]
      %v304 = vld [vmem:[%s242 + $0x30] sm:$0xff]
      %v305 = vld [vmem:[%s242 + $0x38] sm:$0xff]
      %v306 = vld [vmem:[%s242 + $0x40] sm:$0xff]
      %v307 = vld [vmem:[%s242 + $0x48] sm:$0xff]
      %v308 = vld [vmem:[%s242 + $0x50] sm:$0xff]
      %v309 = vld [vmem:[%s242 + $0x58] sm:$0xff]
      %v310 = vld [vmem:[%s242 + $0x60] sm:$0xff]
      %v311 = vld [vmem:[%s242 + $0x68] sm:$0xff]
      %v312 = vld [vmem:[%s242 + $0x70] sm:$0xff]
      %v313 = vld [vmem:[%s242 + $0x78] sm:$0xff]
      %v314 = vld [vmem:[%s242 + $0x80] sm:$0xff]
      %v315 = vld [vmem:[%s242 + $0x88] sm:$0xff]
      %v316 = vld [vmem:[%s242 + $0x90] sm:$0xff]
      %v317 = vld [vmem:[%s242 + $0x98] sm:$0xff]
      %v318 = vld [vmem:[%s242 + $0xa0] sm:$0xff]
      %v319 = vld [vmem:[%s242 + $0xa8] sm:$0xff]
      %v320 = vld [vmem:[%s242 + $0xb0] sm:$0xff]
      %v321 = vld [vmem:[%s242 + $0xb8] sm:$0xff]
      %v322 = vld [vmem:[%s242 + $0xc0] sm:$0xff]
      %v323 = vld [vmem:[%s242 + $0xc8] sm:$0xff]
      %v324 = vld [vmem:[%s242 + $0xd0] sm:$0xff]
      %v325 = vld [vmem:[%s242 + $0xd8] sm:$0xff]
      %v326 = vld [vmem:[%s242 + $0xe0] sm:$0xff]
      %v327 = vld [vmem:[%s242 + $0xe8] sm:$0xff]
      %v328 = vld [vmem:[%s242 + $0xf0] sm:$0xff]
      %v329 = vld [vmem:[%s242 + $0xf8] sm:$0xff]
      %v330 = vld [vmem:[%s3] sm:$0xff]
      %v331 = vld [vmem:[%s3 + $0x8] sm:$0xff]
      %v332 = vld [vmem:[%s3 + $0x10] sm:$0xff]
      %v333 = vld [vmem:[%s3 + $0x18] sm:$0xff]
      %v334 = vld [vmem:[%s3 + $0x20] sm:$0xff]
      %v335 = vld [vmem:[%s3 + $0x28] sm:$0xff]
      %v336 = vld [vmem:[%s3 + $0x30] sm:$0xff]
      %v337 = vld [vmem:[%s3 + $0x38] sm:$0xff]
      %v338 = vld [vmem:[%s3 + $0x40] sm:$0xff]
      %v339 = vld [vmem:[%s3 + $0x48] sm:$0xff]
      %v340 = vld [vmem:[%s3 + $0x50] sm:$0xff]
      %v341 = vld [vmem:[%s3 + $0x58] sm:$0xff]
      %v342 = vld [vmem:[%s3 + $0x60] sm:$0xff]
      %v343 = vld [vmem:[%s3 + $0x68] sm:$0xff]
      %v344 = vld [vmem:[%s3 + $0x70] sm:$0xff]
      %v345 = vld [vmem:[%s3 + $0x78] sm:$0xff]
      %346 = vmatprep.subr.mxu0 0.0
      %347 = vmatpush1.msra.mxu0 %v330
      %348 = vmatprep.subr.mxu0 0.0
      %349 = vmatpush1.msra.mxu0 %v331
      %350 = vmatprep.subr.mxu0 0.0
      %351 = vmatpush1.msra.mxu0 %v332
      %352 = vmatprep.subr.mxu0 0.0
      %353 = vmatpush1.msra.mxu0 %v333
      %354 = vmatprep.subr.mxu0 0.0
      %355 = vmatpush1.msra.mxu0 %v334
      %356 = vmatprep.subr.mxu0 0.0
      %357 = vmatpush1.msra.mxu0 %v335
      %358 = vmatprep.subr.mxu0 0.0
      %359 = vmatpush1.msra.mxu0 %v336
      %360 = vmatprep.subr.mxu0 0.0
      %361 = vmatpush1.msra.mxu0 %v337
      %362 = vmatprep.subr.mxu0 0.0
      %363 = vmatpush1.msra.mxu0 %v338
      %364 = vmatprep.subr.mxu0 0.0
      %365 = vmatpush1.msra.mxu0 %v339
      %366 = vmatprep.subr.mxu0 0.0
      %367 = vmatpush1.msra.mxu0 %v340
      %368 = vmatprep.subr.mxu0 0.0
      %369 = vmatpush1.msra.mxu0 %v341
      %370 = vmatprep.subr.mxu0 0.0
      %371 = vmatpush1.msra.mxu0 %v342
      %372 = vmatprep.subr.mxu0 0.0
      %373 = vmatpush1.msra.mxu0 %v343
      %374 = vmatprep.subr.mxu0 0.0
      %375 = vmatpush1.msra.mxu0 %v344
      %376 = vmatprep.subr.mxu0 0.0
      %377 = vmatpush1.msra.mxu0 %v345
      %378 = vmatprep.subr.mxu0 0.0
      %379 = vmatpush1.msra.mxu0 0.0
      %380 = vmatprep.subr.mxu0 0.0
      %381 = vmatpush1.msra.mxu0 0.0
      %382 = vmatprep.subr.mxu0 0.0
      %383 = vmatpush1.msra.mxu0 0.0
      %384 = vmatprep.subr.mxu0 0.0
      %385 = vmatpush1.msra.mxu0 0.0
      %386 = vmatprep.subr.mxu0 0.0
      %387 = vmatpush1.msra.mxu0 0.0
      %388 = vmatprep.subr.mxu0 0.0
      %389 = vmatpush1.msra.mxu0 0.0
      %390 = vmatprep.subr.mxu0 0.0
      %391 = vmatpush1.msra.mxu0 0.0
      %392 = vmatprep.subr.mxu0 0.0
      %393 = vmatpush1.msra.mxu0 0.0
      %394 = vmatprep.subr.mxu0 0.0
      %395 = vmatpush1.msra.mxu0 0.0
      %396 = vmatprep.subr.mxu0 0.0
      %397 = vmatpush1.msra.mxu0 0.0
      %398 = vmatprep.subr.mxu0 0.0
      %399 = vmatpush1.msra.mxu0 0.0
      %400 = vmatprep.subr.mxu0 0.0
      %401 = vmatpush1.msra.mxu0 0.0
      %402 = vmatprep.subr.mxu0 0.0
      %403 = vmatpush1.msra.mxu0 0.0
      %404 = vmatprep.subr.mxu0 0.0
      %405 = vmatpush1.msra.mxu0 0.0
      %406 = vmatprep.subr.mxu0 0.0
      %407 = vmatpush1.msra.mxu0 0.0
      %408 = vmatprep.subr.mxu0 0.0
      %409 = vmatpush1.msra.mxu0 0.0
      %410 = vmatprep.mubr.f32.mxu0 0.0
      %411 = vmatmul.mubr.f32.gmra.mrb[0].mxu0 %v298
      %v412 = vpop.f32.mrb[0].mxu0
      %v413 = vadd.f32 0.0, %v412
      %v414 = vpop.f32.mrb[0].mxu0
      %415 = vmatprep.mubr.f32.mxu0 0.0
      %416 = vmatmul.mubr.f32.gmra.mrb[0].mxu0 %v299
      %v417 = vpop.f32.mrb[0].mxu0
      %v418 = vadd.f32 0.0, %v417
      %v419 = vpop.f32.mrb[0].mxu0
      %420 = vmatprep.mubr.f32.mxu0 0.0
      %421 = vmatmul.mubr.f32.gmra.mrb[0].mxu0 %v300
      %v422 = vpop.f32.mrb[0].mxu0
      %v423 = vadd.f32 0.0, %v422
      %v424 = vpop.f32.mrb[0].mxu0
      %425 = vmatprep.mubr.f32.mxu0 0.0
      %426 = vmatmul.mubr.f32.gmra.mrb[0].mxu0 %v301
      %v427 = vpop.f32.mrb[0].mxu0
      %v428 = vadd.f32 0.0, %v427
      %v429 = vpop.f32.mrb[0].mxu0
      %430 = vmatprep.mubr.f32.mxu0 0.0
      %431 = vmatmul.mubr.f32.gmra.mrb[0].mxu0 %v302
      %v432 = vpop.f32.mrb[0].mxu0
      %v433 = vadd.f32 0.0, %v432
      %v434 = vpop.f32.mrb[0].mxu0
      %435 = vmatprep.mubr.f32.mxu0 0.0
      %436 = vmatmul.mubr.f32.gmra.mrb[0].mxu0 %v303
      %v437 = vpop.f32.mrb[0].mxu0
      %v438 = vadd.f32 0.0, %v437
      %v439 = vpop.f32.mrb[0].mxu0
      %440 = vmatprep.mubr.f32.mxu0 0.0
      %441 = vmatmul.mubr.f32.gmra.mrb[0].mxu0 %v304
      %v442 = vpop.f32.mrb[0].mxu0
      %v443 = vadd.f32 0.0, %v442
      %v444 = vpop.f32.mrb[0].mxu0
      %445 = vmatprep.mubr.f32.mxu0 0.0
      %446 = vmatmul.mubr.f32.gmra.mrb[0].mxu0 %v305
      %v447 = vpop.f32.mrb[0].mxu0
      %v448 = vadd.f32 0.0, %v447
      %v449 = vpop.f32.mrb[0].mxu0
      %450 = vmatprep.mubr.f32.mxu0 0.0
      %451 = vmatmul.mubr.f32.gmra.mrb[0].mxu0 %v306
      %v452 = vpop.f32.mrb[0].mxu0
      %v453 = vadd.f32 0.0, %v452
      %v454 = vpop.f32.mrb[0].mxu0
      %455 = vmatprep.mubr.f32.mxu0 0.0
      %456 = vmatmul.mubr.f32.gmra.mrb[0].mxu0 %v307
      %v457 = vpop.f32.mrb[0].mxu0
      %v458 = vadd.f32 0.0, %v457
      %v459 = vpop.f32.mrb[0].mxu0
      %460 = vmatprep.mubr.f32.mxu0 0.0
      %461 = vmatmul.mubr.f32.gmra.mrb[0].mxu0 %v308
      %v462 = vpop.f32.mrb[0].mxu0
      %v463 = vadd.f32 0.0, %v462
      %v464 = vpop.f32.mrb[0].mxu0
      %465 = vmatprep.mubr.f32.mxu0 0.0
      %466 = vmatmul.mubr.f32.gmra.mrb[0].mxu0 %v309
      %v467 = vpop.f32.mrb[0].mxu0
      %v468 = vadd.f32 0.0, %v467
      %v469 = vpop.f32.mrb[0].mxu0
      %470 = vmatprep.mubr.f32.mxu0 0.0
      %471 = vmatmul.mubr.f32.gmra.mrb[0].mxu0 %v310
      %v472 = vpop.f32.mrb[0].mxu0
      %v473 = vadd.f32 0.0, %v472
      %v474 = vpop.f32.mrb[0].mxu0
      %475 = vmatprep.mubr.f32.mxu0 0.0
      %476 = vmatmul.mubr.f32.gmra.mrb[0].mxu0 %v311
      %v477 = vpop.f32.mrb[0].mxu0
      %v478 = vadd.f32 0.0, %v477
      %v479 = vpop.f32.mrb[0].mxu0
      %480 = vmatprep.mubr.f32.mxu0 0.0
      %481 = vmatmul.mubr.f32.gmra.mrb[0].mxu0 %v312
      %v482 = vpop.f32.mrb[0].mxu0
      %v483 = vadd.f32 0.0, %v482
      %v484 = vpop.f32.mrb[0].mxu0
      %485 = vmatprep.mubr.f32.mxu0 0.0
      %486 = vmatmul.mubr.f32.gmra.mrb[0].mxu0 %v313
      %v487 = vpop.f32.mrb[0].mxu0
      %v488 = vadd.f32 0.0, %v487
      %v489 = vpop.f32.mrb[0].mxu0
      %490 = vmatprep.mubr.f32.mxu0 0.0
      %491 = vmatmul.mubr.f32.gmra.mrb[0].mxu0 %v314
      %v492 = vpop.f32.mrb[0].mxu0
      %v493 = vadd.f32 0.0, %v492
      %v494 = vpop.f32.mrb[0].mxu0
      %495 = vmatprep.mubr.f32.mxu0 0.0
      %496 = vmatmul.mubr.f32.gmra.mrb[0].mxu0 %v315
      %v497 = vpop.f32.mrb[0].mxu0
      %v498 = vadd.f32 0.0, %v497
      %v499 = vpop.f32.mrb[0].mxu0
      %500 = vmatprep.mubr.f32.mxu0 0.0
      %501 = vmatmul.mubr.f32.gmra.mrb[0].mxu0 %v316
      %v502 = vpop.f32.mrb[0].mxu0
      %v503 = vadd.f32 0.0, %v502
      %v504 = vpop.f32.mrb[0].mxu0
      %505 = vmatprep.mubr.f32.mxu0 0.0
      %506 = vmatmul.mubr.f32.gmra.mrb[0].mxu0 %v317
      %v507 = vpop.f32.mrb[0].mxu0
      %v508 = vadd.f32 0.0, %v507
      %v509 = vpop.f32.mrb[0].mxu0
      %510 = vmatprep.mubr.f32.mxu0 0.0
      %511 = vmatmul.mubr.f32.gmra.mrb[0].mxu0 %v318
      %v512 = vpop.f32.mrb[0].mxu0
      %v513 = vadd.f32 0.0, %v512
      %v514 = vpop.f32.mrb[0].mxu0
      %515 = vmatprep.mubr.f32.mxu0 0.0
      %516 = vmatmul.mubr.f32.gmra.mrb[0].mxu0 %v319
      %v517 = vpop.f32.mrb[0].mxu0
      %v518 = vadd.f32 0.0, %v517
      %v519 = vpop.f32.mrb[0].mxu0
      %520 = vmatprep.mubr.f32.mxu0 0.0
      %521 = vmatmul.mubr.f32.gmra.mrb[0].mxu0 %v320
      %v522 = vpop.f32.mrb[0].mxu0
      %v523 = vadd.f32 0.0, %v522
      %v524 = vpop.f32.mrb[0].mxu0
      %525 = vmatprep.mubr.f32.mxu0 0.0
      %526 = vmatmul.mubr.f32.gmra.mrb[0].mxu0 %v321
      %v527 = vpop.f32.mrb[0].mxu0
      %v528 = vadd.f32 0.0, %v527
      %v529 = vpop.f32.mrb[0].mxu0
      %530 = vmatprep.mubr.f32.mxu0 0.0
      %531 = vmatmul.mubr.f32.gmra.mrb[0].mxu0 %v322
      %v532 = vpop.f32.mrb[0].mxu0
      %v533 = vadd.f32 0.0, %v532
      %v534 = vpop.f32.mrb[0].mxu0
      %535 = vmatprep.mubr.f32.mxu0 0.0
      %536 = vmatmul.mubr.f32.gmra.mrb[0].mxu0 %v323
      %v537 = vpop.f32.mrb[0].mxu0
      %v538 = vadd.f32 0.0, %v537
      %v539 = vpop.f32.mrb[0].mxu0
      %540 = vmatprep.mubr.f32.mxu0 0.0
      %541 = vmatmul.mubr.f32.gmra.mrb[0].mxu0 %v324
      %v542 = vpop.f32.mrb[0].mxu0
      %v543 = vadd.f32 0.0, %v542
      %v544 = vpop.f32.mrb[0].mxu0
      %545 = vmatprep.mubr.f32.mxu0 0.0
      %546 = vmatmul.mubr.f32.gmra.mrb[0].mxu0 %v325
      %v547 = vpop.f32.mrb[0].mxu0
      %v548 = vadd.f32 0.0, %v547
      %v549 = vpop.f32.mrb[0].mxu0
      %550 = vmatprep.mubr.f32.mxu0 0.0
      %551 = vmatmul.mubr.f32.gmra.mrb[0].mxu0 %v326
      %v552 = vpop.f32.mrb[0].mxu0
      %v553 = vadd.f32 0.0, %v552
      %v554 = vpop.f32.mrb[0].mxu0
      %555 = vmatprep.mubr.f32.mxu0 0.0
      %556 = vmatmul.mubr.f32.gmra.mrb[0].mxu0 %v327
      %v557 = vpop.f32.mrb[0].mxu0
      %v558 = vadd.f32 0.0, %v557
      %v559 = vpop.f32.mrb[0].mxu0
      %560 = vmatprep.mubr.f32.mxu0 0.0
      %561 = vmatmul.mubr.f32.gmra.mrb[0].mxu0 %v328
      %v562 = vpop.f32.mrb[0].mxu0
      %v563 = vadd.f32 0.0, %v562
      %v564 = vpop.f32.mrb[0].mxu0
      %565 = vmatprep.mubr.f32.mxu0 0.0
      %566 = vmatmul.mubr.f32.gmra.mrb[0].mxu0 %v329
      %v567 = vpop.f32.mrb[0].mxu0
      %v568 = vadd.f32 0.0, %v567
      %v569 = vpop.f32.mrb[0].mxu0
      %570 = vdwg.mxu0
      %571 = vmatprep.subr.mxu0 0.0
      %572 = vmatpush1.msra.mxu0 %v282
      %573 = vmatprep.subr.mxu0 0.0
      %574 = vmatpush1.msra.mxu0 %v283
      %575 = vmatprep.subr.mxu0 0.0
      %576 = vmatpush1.msra.mxu0 %v284
      %577 = vmatprep.subr.mxu0 0.0
      %578 = vmatpush1.msra.mxu0 %v285
      %579 = vmatprep.subr.mxu0 0.0
      %580 = vmatpush1.msra.mxu0 %v286
      %581 = vmatprep.subr.mxu0 0.0
      %582 = vmatpush1.msra.mxu0 %v287
      %583 = vmatprep.subr.mxu0 0.0
      %584 = vmatpush1.msra.mxu0 %v288
      %585 = vmatprep.subr.mxu0 0.0
      %586 = vmatpush1.msra.mxu0 %v289
      %587 = vmatprep.subr.mxu0 0.0
      %588 = vmatpush1.msra.mxu0 %v290
      %589 = vmatprep.subr.mxu0 0.0
      %590 = vmatpush1.msra.mxu0 %v291
      %591 = vmatprep.subr.mxu0 0.0
      %592 = vmatpush1.msra.mxu0 %v292
      %593 = vmatprep.subr.mxu0 0.0
      %594 = vmatpush1.msra.mxu0 %v293
      %595 = vmatprep.subr.mxu0 0.0
      %596 = vmatpush1.msra.mxu0 %v294
      %597 = vmatprep.subr.mxu0 0.0
      %598 = vmatpush1.msra.mxu0 %v295
      %599 = vmatprep.subr.mxu0 0.0
      %600 = vmatpush1.msra.mxu0 %v296
      %601 = vmatprep.subr.mxu0 0.0
      %602 = vmatpush1.msra.mxu0 %v297
      %603 = vmatprep.subr.mxu0 0.0
      %604 = vmatpush1.msra.mxu0 0.0
      %605 = vmatprep.subr.mxu0 0.0
      %606 = vmatpush1.msra.mxu0 0.0
      %607 = vmatprep.subr.mxu0 0.0
      %608 = vmatpush1.msra.mxu0 0.0
      %609 = vmatprep.subr.mxu0 0.0
      %610 = vmatpush1.msra.mxu0 0.0
      %611 = vmatprep.subr.mxu0 0.0
      %612 = vmatpush1.msra.mxu0 0.0
      %613 = vmatprep.subr.mxu0 0.0
      %614 = vmatpush1.msra.mxu0 0.0
      %615 = vmatprep.subr.mxu0 0.0
      %616 = vmatpush1.msra.mxu0 0.0
      %617 = vmatprep.subr.mxu0 0.0
      %618 = vmatpush1.msra.mxu0 0.0
      %619 = vmatprep.subr.mxu0 0.0
      %620 = vmatpush1.msra.mxu0 0.0
      %621 = vmatprep.subr.mxu0 0.0
      %622 = vmatpush1.msra.mxu0 0.0
      %623 = vmatprep.subr.mxu0 0.0
      %624 = vmatpush1.msra.mxu0 0.0
      %625 = vmatprep.subr.mxu0 0.0
      %626 = vmatpush1.msra.mxu0 0.0
      %627 = vmatprep.subr.mxu0 0.0
      %628 = vmatpush1.msra.mxu0 0.0
      %629 = vmatprep.subr.mxu0 0.0
      %630 = vmatpush1.msra.mxu0 0.0
      %631 = vmatprep.subr.mxu0 0.0
      %632 = vmatpush1.msra.mxu0 0.0
      %633 = vmatprep.subr.mxu0 0.0
      %634 = vmatpush1.msra.mxu0 0.0
      %635 = vmatprep.mubr.f32.mxu0 0.0
      %636 = vmatmul.mubr.f32.gmra.mrb[0].mxu0 %v250
      %v637 = vpop.f32.mrb[0].mxu0
      %v638 = vadd.f32 %v413, %v637
      %v639 = vpop.f32.mrb[0].mxu0
      %640 = vmatprep.mubr.f32.mxu0 0.0
      %641 = vmatmul.mubr.f32.gmra.mrb[0].mxu0 %v251
      %v642 = vpop.f32.mrb[0].mxu0
      %v643 = vadd.f32 %v418, %v642
      %v644 = vpop.f32.mrb[0].mxu0
      %645 = vmatprep.mubr.f32.mxu0 0.0
      %646 = vmatmul.mubr.f32.gmra.mrb[0].mxu0 %v252
      %v647 = vpop.f32.mrb[0].mxu0
      %v648 = vadd.f32 %v423, %v647
      %v649 = vpop.f32.mrb[0].mxu0
      %650 = vmatprep.mubr.f32.mxu0 0.0
      %651 = vmatmul.mubr.f32.gmra.mrb[0].mxu0 %v253
      %v652 = vpop.f32.mrb[0].mxu0
      %v653 = vadd.f32 %v428, %v652
      %v654 = vpop.f32.mrb[0].mxu0
      %655 = vmatprep.mubr.f32.mxu0 0.0
      %656 = vmatmul.mubr.f32.gmra.mrb[0].mxu0 %v254
      %v657 = vpop.f32.mrb[0].mxu0
      %v658 = vadd.f32 %v433, %v657
      %v659 = vpop.f32.mrb[0].mxu0
      %660 = vmatprep.mubr.f32.mxu0 0.0
      %661 = vmatmul.mubr.f32.gmra.mrb[0].mxu0 %v255
      %v662 = vpop.f32.mrb[0].mxu0
      %v663 = vadd.f32 %v438, %v662
      %v664 = vpop.f32.mrb[0].mxu0
      %665 = vmatprep.mubr.f32.mxu0 0.0
      %666 = vmatmul.mubr.f32.gmra.mrb[0].mxu0 %v256
      %v667 = vpop.f32.mrb[0].mxu0
      %v668 = vadd.f32 %v443, %v667
      %v669 = vpop.f32.mrb[0].mxu0
      %670 = vmatprep.mubr.f32.mxu0 0.0
      %671 = vmatmul.mubr.f32.gmra.mrb[0].mxu0 %v257
      %v672 = vpop.f32.mrb[0].mxu0
      %v673 = vadd.f32 %v448, %v672
      %v674 = vpop.f32.mrb[0].mxu0
      %675 = vmatprep.mubr.f32.mxu0 0.0
      %676 = vmatmul.mubr.f32.gmra.mrb[0].mxu0 %v258
      %v677 = vpop.f32.mrb[0].mxu0
      %v678 = vadd.f32 %v453, %v677
      %v679 = vpop.f32.mrb[0].mxu0
      %680 = vmatprep.mubr.f32.mxu0 0.0
      %681 = vmatmul.mubr.f32.gmra.mrb[0].mxu0 %v259
      %v682 = vpop.f32.mrb[0].mxu0
      %v683 = vadd.f32 %v458, %v682
      %v684 = vpop.f32.mrb[0].mxu0
      %685 = vmatprep.mubr.f32.mxu0 0.0
      %686 = vmatmul.mubr.f32.gmra.mrb[0].mxu0 %v260
      %v687 = vpop.f32.mrb[0].mxu0
      %v688 = vadd.f32 %v463, %v687
      %v689 = vpop.f32.mrb[0].mxu0
      %690 = vmatprep.mubr.f32.mxu0 0.0
      %691 = vmatmul.mubr.f32.gmra.mrb[0].mxu0 %v261
      %v692 = vpop.f32.mrb[0].mxu0
      %v693 = vadd.f32 %v468, %v692
      %v694 = vpop.f32.mrb[0].mxu0
      %695 = vmatprep.mubr.f32.mxu0 0.0
      %696 = vmatmul.mubr.f32.gmra.mrb[0].mxu0 %v262
      %v697 = vpop.f32.mrb[0].mxu0
      %v698 = vadd.f32 %v473, %v697
      %v699 = vpop.f32.mrb[0].mxu0
      %700 = vmatprep.mubr.f32.mxu0 0.0
      %701 = vmatmul.mubr.f32.gmra.mrb[0].mxu0 %v263
      %v702 = vpop.f32.mrb[0].mxu0
      %v703 = vadd.f32 %v478, %v702
      %v704 = vpop.f32.mrb[0].mxu0
      %705 = vmatprep.mubr.f32.mxu0 0.0
      %706 = vmatmul.mubr.f32.gmra.mrb[0].mxu0 %v264
      %v707 = vpop.f32.mrb[0].mxu0
      %v708 = vadd.f32 %v483, %v707
      %v709 = vpop.f32.mrb[0].mxu0
      %710 = vmatprep.mubr.f32.mxu0 0.0
      %711 = vmatmul.mubr.f32.gmra.mrb[0].mxu0 %v265
      %v712 = vpop.f32.mrb[0].mxu0
      %v713 = vadd.f32 %v488, %v712
      %v714 = vpop.f32.mrb[0].mxu0
      %715 = vmatprep.mubr.f32.mxu0 0.0
      %716 = vmatmul.mubr.f32.gmra.mrb[0].mxu0 %v266
      %v717 = vpop.f32.mrb[0].mxu0
      %v718 = vadd.f32 %v493, %v717
      %v719 = vpop.f32.mrb[0].mxu0
      %720 = vmatprep.mubr.f32.mxu0 0.0
      %721 = vmatmul.mubr.f32.gmra.mrb[0].mxu0 %v267
      %v722 = vpop.f32.mrb[0].mxu0
      %v723 = vadd.f32 %v498, %v722
      %v724 = vpop.f32.mrb[0].mxu0
      %725 = vmatprep.mubr.f32.mxu0 0.0
      %726 = vmatmul.mubr.f32.gmra.mrb[0].mxu0 %v268
      %v727 = vpop.f32.mrb[0].mxu0
      %v728 = vadd.f32 %v503, %v727
      %v729 = vpop.f32.mrb[0].mxu0
      %730 = vmatprep.mubr.f32.mxu0 0.0
      %731 = vmatmul.mubr.f32.gmra.mrb[0].mxu0 %v269
      %v732 = vpop.f32.mrb[0].mxu0
      %v733 = vadd.f32 %v508, %v732
      %v734 = vpop.f32.mrb[0].mxu0
      %735 = vmatprep.mubr.f32.mxu0 0.0
      %736 = vmatmul.mubr.f32.gmra.mrb[0].mxu0 %v270
      %v737 = vpop.f32.mrb[0].mxu0
      %v738 = vadd.f32 %v513, %v737
      %v739 = vpop.f32.mrb[0].mxu0
      %740 = vmatprep.mubr.f32.mxu0 0.0
      %741 = vmatmul.mubr.f32.gmra.mrb[0].mxu0 %v271
      %v742 = vpop.f32.mrb[0].mxu0
      %v743 = vadd.f32 %v518, %v742
      %v744 = vpop.f32.mrb[0].mxu0
      %745 = vmatprep.mubr.f32.mxu0 0.0
      %746 = vmatmul.mubr.f32.gmra.mrb[0].mxu0 %v272
      %v747 = vpop.f32.mrb[0].mxu0
      %v748 = vadd.f32 %v523, %v747
      %v749 = vpop.f32.mrb[0].mxu0
      %750 = vmatprep.mubr.f32.mxu0 0.0
      %751 = vmatmul.mubr.f32.gmra.mrb[0].mxu0 %v273
      %v752 = vpop.f32.mrb[0].mxu0
      %v753 = vadd.f32 %v528, %v752
      %v754 = vpop.f32.mrb[0].mxu0
      %755 = vmatprep.mubr.f32.mxu0 0.0
      %756 = vmatmul.mubr.f32.gmra.mrb[0].mxu0 %v274
      %v757 = vpop.f32.mrb[0].mxu0
      %v758 = vadd.f32 %v533, %v757
      %v759 = vpop.f32.mrb[0].mxu0
      %760 = vmatprep.mubr.f32.mxu0 0.0
      %761 = vmatmul.mubr.f32.gmra.mrb[0].mxu0 %v275
      %v762 = vpop.f32.mrb[0].mxu0
      %v763 = vadd.f32 %v538, %v762
      %v764 = vpop.f32.mrb[0].mxu0
      %765 = vmatprep.mubr.f32.mxu0 0.0
      %766 = vmatmul.mubr.f32.gmra.mrb[0].mxu0 %v276
      %v767 = vpop.f32.mrb[0].mxu0
      %v768 = vadd.f32 %v543, %v767
      %v769 = vpop.f32.mrb[0].mxu0
      %770 = vmatprep.mubr.f32.mxu0 0.0
      %771 = vmatmul.mubr.f32.gmra.mrb[0].mxu0 %v277
      %v772 = vpop.f32.mrb[0].mxu0
      %v773 = vadd.f32 %v548, %v772
      %v774 = vpop.f32.mrb[0].mxu0
      %775 = vmatprep.mubr.f32.mxu0 0.0
      %776 = vmatmul.mubr.f32.gmra.mrb[0].mxu0 %v278
      %v777 = vpop.f32.mrb[0].mxu0
      %v778 = vadd.f32 %v553, %v777
      %v779 = vpop.f32.mrb[0].mxu0
      %780 = vmatprep.mubr.f32.mxu0 0.0
      %781 = vmatmul.mubr.f32.gmra.mrb[0].mxu0 %v279
      %v782 = vpop.f32.mrb[0].mxu0
      %v783 = vadd.f32 %v558, %v782
      %v784 = vpop.f32.mrb[0].mxu0
      %785 = vmatprep.mubr.f32.mxu0 0.0
      %786 = vmatmul.mubr.f32.gmra.mrb[0].mxu0 %v280
      %v787 = vpop.f32.mrb[0].mxu0
      %v788 = vadd.f32 %v563, %v787
      %v789 = vpop.f32.mrb[0].mxu0
      %790 = vmatprep.mubr.f32.mxu0 0.0
      %791 = vmatmul.mubr.f32.gmra.mrb[0].mxu0 %v281
      %v792 = vpop.f32.mrb[0].mxu0
      %v793 = vadd.f32 %v568, %v792
      %v794 = vpop.f32.mrb[0].mxu0
      %795 = vdwg.mxu0
      %v796 = vld [vmem:[%s4] sm:$0x1]
      %v798 = vlaneseq
      %v799 = vshrl.u32 %v798, 7
      %v800 = vsub.s32 0, %v799
      %v801 = vrot.slane %v796, %v800
      %v803 = vadd.f32 %v638, %v801
      %v804 = vadd.f32 %v643, %v801
      %v805 = vadd.f32 %v648, %v801
      %v806 = vadd.f32 %v653, %v801
      %v807 = vadd.f32 %v658, %v801
      %v808 = vadd.f32 %v663, %v801
      %v809 = vadd.f32 %v668, %v801
      %v810 = vadd.f32 %v673, %v801
      %v811 = vadd.f32 %v678, %v801
      %v812 = vadd.f32 %v683, %v801
      %v813 = vadd.f32 %v688, %v801
      %v814 = vadd.f32 %v693, %v801
      %v815 = vadd.f32 %v698, %v801
      %v816 = vadd.f32 %v703, %v801
      %v817 = vadd.f32 %v708, %v801
      %v818 = vadd.f32 %v713, %v801
      %v819 = vadd.f32 %v718, %v801
      %v820 = vadd.f32 %v723, %v801
      %v821 = vadd.f32 %v728, %v801
      %v822 = vadd.f32 %v733, %v801
      %v823 = vadd.f32 %v738, %v801
      %v824 = vadd.f32 %v743, %v801
      %v825 = vadd.f32 %v748, %v801
      %v826 = vadd.f32 %v753, %v801
      %v827 = vadd.f32 %v758, %v801
      %v828 = vadd.f32 %v763, %v801
      %v829 = vadd.f32 %v768, %v801
      %v830 = vadd.f32 %v773, %v801
      %v831 = vadd.f32 %v778, %v801
      %v832 = vadd.f32 %v783, %v801
      %v833 = vadd.f32 %v788, %v801
      %v834 = vadd.f32 %v793, %v801
      %835 = vst [vmem:[%s248] sm:$0xff] %v803
      %836 = vst [vmem:[%s248 + $0x8] sm:$0xff] %v804
      %837 = vst [vmem:[%s248 + $0x10] sm:$0xff] %v805
      %838 = vst [vmem:[%s248 + $0x18] sm:$0xff] %v806
      %839 = vst [vmem:[%s248 + $0x20] sm:$0xff] %v807
      %840 = vst [vmem:[%s248 + $0x28] sm:$0xff] %v808
      %841 = vst [vmem:[%s248 + $0x30] sm:$0xff] %v809
      %842 = vst [vmem:[%s248 + $0x38] sm:$0xff] %v810
      %843 = vst [vmem:[%s248 + $0x40] sm:$0xff] %v811
      %844 = vst [vmem:[%s248 + $0x48] sm:$0xff] %v812
      %845 = vst [vmem:[%s248 + $0x50] sm:$0xff] %v813
      %846 = vst [vmem:[%s248 + $0x58] sm:$0xff] %v814
      %847 = vst [vmem:[%s248 + $0x60] sm:$0xff] %v815
      %848 = vst [vmem:[%s248 + $0x68] sm:$0xff] %v816
      %849 = vst [vmem:[%s248 + $0x70] sm:$0xff] %v817
      %850 = vst [vmem:[%s248 + $0x78] sm:$0xff] %v818
      %851 = vst [vmem:[%s248 + $0x80] sm:$0xff] %v819
      %852 = vst [vmem:[%s248 + $0x88] sm:$0xff] %v820
      %853 = vst [vmem:[%s248 + $0x90] sm:$0xff] %v821
      %854 = vst [vmem:[%s248 + $0x98] sm:$0xff] %v822
      %855 = vst [vmem:[%s248 + $0xa0] sm:$0xff] %v823
      %856 = vst [vmem:[%s248 + $0xa8] sm:$0xff] %v824
      %857 = vst [vmem:[%s248 + $0xb0] sm:$0xff] %v825
      %858 = vst [vmem:[%s248 + $0xb8] sm:$0xff] %v826
      %859 = vst [vmem:[%s248 + $0xc0] sm:$0xff] %v827
      %860 = vst [vmem:[%s248 + $0xc8] sm:$0xff] %v828
      %861 = vst [vmem:[%s248 + $0xd0] sm:$0xff] %v829
      %862 = vst [vmem:[%s248 + $0xd8] sm:$0xff] %v830
      %863 = vst [vmem:[%s248 + $0xe0] sm:$0xff] %v831
      %864 = vst [vmem:[%s248 + $0xe8] sm:$0xff] %v832
      %865 = vst [vmem:[%s248 + $0xf0] sm:$0xff] %v833
      %866 = vst [vmem:[%s248 + $0xf8] sm:$0xff] %v834
      %s867 = smul.u32 32, %s16
      %p868 = scmp.lt.s32.totalorder %s867, 63
      %s869 = scalar_select %p868, %s867, 63
      %s870 = smul.addr %s869, 8
      %s871 = scalar_lea.vmem %s5, %s870
      // Predicated region
      $region41: #{sage_forward.4} parent=39 // pred_check
        %p872 = pneg %p149
      $region42: #{sage_forward.4} parent=39 // pred_check_branch
        %874 = sbr.rel (%p872) target = $region44
      $region43: #{sage_forward.4} parent=39 // pred_region
        %s875 = smul.u32 32, %s16
      $region44: #{sage_forward.4} parent=39 // pred_fallthru
        _
    $region40: #{sage_forward.4} parent=5 // pred_fallthru
      _
    %p876 = scmp.le.s32.totalorder 2, %s11
    // Predicated region
    $region45: #{sage_forward.4} parent=5 // pred_check
      %p877 = pneg %p876
    $region46: #{sage_forward.4} parent=5 // pred_check_branch
      %879 = sbr.rel (%p877) target = $region48
    $region47: #{sage_forward.4} parent=5 // pred_region
      %s880 = ssub.s32 %s11, 2
      // Predicated region
      $region49: #{sage_forward.4} parent=47 // pred_check
        %p881 = pneg %p155
      $region50: #{sage_forward.4} parent=47 // pred_check_branch
        %883 = sbr.rel (%p881) target = $region52
      $region51: #{sage_forward.4} parent=47 // pred_region
        %s884 = smul.u32 32, %s17
        %p885 = scmp.lt.s32.totalorder %s884, 63
        %s886 = scalar_select %p885, %s884, 63
        %s887 = smul.addr %s886, 8
        %s888 = scalar_lea.vmem %s5, %s887
      $region52: #{sage_forward.4} parent=47 // pred_fallthru
        _
    $region48: #{sage_forward.4} parent=5 // pred_fallthru
      _
  $region6: #{sage_forward.4} parent=0 // loop_footer
    %s15 = sadd.s32 1, %s11
  $region7: #{sage_forward.4} parent=0 // loop_footer_branch
    %10 = sbr.rel target = $region3
  $region8: #{sage_forward.4} parent=0 // loop_exit
    _

// kernel: sage_forward.5
$region0: #{sage_forward.5}
  #allocation0 [shape = 'u32[]', space=smem, size = 0x4, offset = 0x4, fixed_abs, tag = 'smem constant byte address 0x4 - core index']
  #allocation1 [shape = 'u32[144,128]{1,0:T(1,128)}', space=vmem, size = 0x12000, scoped, tag = 'internal scratch']
  #allocation2 [shape = 'f32[128,128]{1,0:T(8,128)}', space=vmem, size = 0x10000, scoped, tag = 'scratch operand']
  %s0 = inlined_call_operand.vmem [shape: s32[1,512], index: 0, kind: input, shape index: {}]
  %s1 = inlined_call_operand.vmem [shape: f32[512,128], index: 1, kind: input, shape index: {}]
  %s2 = inlined_call_operand.vmem [shape: f32[128,128], index: 2, kind: input, shape index: {}]
  %s3 = inlined_call_operand.vmem [shape: f32[128,1], index: 3, kind: input, shape index: {}]
  %s4 = inlined_call_operand.vmem [shape: f32[128,128], index: 4, kind: input, shape index: {}]
  %s5 = inlined_call_operand.vmem [shape: f32[128,128], index: 5, kind: input, shape index: {}]
  %s6 = inlined_call_operand.vmem [shape: f32[1,128], index: 6, kind: input, shape index: {}]
  %s7 = inlined_call_operand.vmem [shape: f32[128,128], index: 7, kind: output, shape index: {}]
  %s8 = sld [smem:[#allocation0]]
  $region69: #{sage_forward.5} parent=0
    _
  %s10 = ssub.s32 1, %s8
  %s11 = scalar_select 0, %s10, %s8
  loop: start=0, step=1, limit=4
  $region2: #{sage_forward.5} parent=0 // loop_pre_header
    _
  $region3: #{sage_forward.5} parent=0 // loop_header
    %s13 = sphi 0, %s17
    %p14 = scmp.ge.s32.totalorder %s13, 4
    %s20 = sphi 0, %s32
    %s21 = sphi 0, %s28
    %s22 = sphi 0, %s20
    %s23 = sphi 0, %s21
    %s24 = sphi 0, %s22
    %s25 = sphi 0, %s23
    %s35 = sphi 0, %s37
    %s38 = sphi 0, %s35
    %s39 = sphi 0, %s38
    %s55 = sphi 0, %s39
    %s61 = sphi 0, %s63
    %s64 = sphi 0, %s61
    %s65 = sphi 0, %s64
    %s81 = sphi 0, %s65
    %s87 = sphi 0, %s89
    %s90 = sphi 0, %s87
    %s91 = sphi 0, %s90
    %s107 = sphi 0, %s91
    %s113 = sphi 0, %s115
    %s116 = sphi 0, %s113
    %s117 = sphi 0, %s116
    %s133 = sphi 0, %s117
    %s137 = sphi 0, %s137
    %s139 = sphi 0, %s137
    %s140 = sphi 0, %s139
    %s154 = sphi 0, %s140
    %s158 = sphi 0, %s158
    %s160 = sphi 0, %s158
    %s161 = sphi 0, %s160
    %s175 = sphi 0, %s161
    %s179 = sphi 0, %s179
    %s181 = sphi 0, %s179
    %s182 = sphi 0, %s181
    %s196 = sphi 0, %s182
    %s202 = sphi 0, %s204
    %s205 = sphi 0, %s202
    %s206 = sphi 0, %s205
    %s222 = sphi 0, %s206
  $region4: #{sage_forward.5} parent=0 // loop_header_branch
    %16 = sbr.rel (%p14) target = $region8
  $region5: #{sage_forward.5} parent=0 // loop_body
    %s18 = ssub.s32 %s13, 1
    %s19 = ssub.s32 %s13, 2
    %s26 = sadd.s32 1, %s21
    %p27 = scmp.ge.s32.totalorder %s26, 2
    %s28 = scalar_select %p27, 0, %s26
    %s29 = sadd.s32 1, %s20
    %s30 = scalar_select %p27, %s29, %s20
    %p31 = scmp.ge.s32.totalorder %s30, 1
    %s32 = scalar_select %p31, 0, %s30
    %s33 = ssub.s32 %s21, %s28
    %p34 = scmp.eq.s32.totalorder %s33, 0
    %s36 = sadd.s32 %s35, 1
    %s37 = scalar_select %p34, %s35, %s36
    %p40 = pneg %p34
    %p41 = scmp.eq.s32.totalorder %s13, 1
    %p42 = por %p40, %p41
    %p43 = scmp.ne.s32.totalorder %s35, %s38
    %p44 = scmp.eq.s32.totalorder %s13, 0
    %p45 = por %p43, %p44
    %p46 = scmp.ne.s32.totalorder %s35, %s38
    %p47 = scmp.eq.s32.totalorder %s18, 1
    %p48 = por %p46, %p47
    %p49 = scmp.ne.s32.totalorder %s38, %s39
    %p50 = scmp.eq.s32.totalorder %s18, 0
    %p51 = por %p49, %p50
    %p52 = scmp.ne.s32.totalorder %s38, %s39
    %p53 = scmp.eq.s32.totalorder %s19, 1
    %p54 = por %p52, %p53
    %p56 = scmp.ne.s32.totalorder %s39, %s55
    %p57 = scmp.eq.s32.totalorder %s19, 0
    %p58 = por %p56, %p57
    %s59 = ssub.s32 %s21, %s28
    %p60 = scmp.eq.s32.totalorder %s59, 0
    %s62 = sadd.s32 %s61, 1
    %s63 = scalar_select %p60, %s61, %s62
    %p66 = pneg %p60
    %p67 = scmp.eq.s32.totalorder %s13, 1
    %p68 = por %p66, %p67
    %p69 = scmp.ne.s32.totalorder %s61, %s64
    %p70 = scmp.eq.s32.totalorder %s13, 0
    %p71 = por %p69, %p70
    %p72 = scmp.ne.s32.totalorder %s61, %s64
    %p73 = scmp.eq.s32.totalorder %s18, 1
    %p74 = por %p72, %p73
    %p75 = scmp.ne.s32.totalorder %s64, %s65
    %p76 = scmp.eq.s32.totalorder %s18, 0
    %p77 = por %p75, %p76
    %p78 = scmp.ne.s32.totalorder %s64, %s65
    %p79 = scmp.eq.s32.totalorder %s19, 1
    %p80 = por %p78, %p79
    %p82 = scmp.ne.s32.totalorder %s65, %s81
    %p83 = scmp.eq.s32.totalorder %s19, 0
    %p84 = por %p82, %p83
    %s85 = ssub.s32 %s20, %s32
    %p86 = scmp.eq.s32.totalorder %s85, 0
    %s88 = sadd.s32 %s87, 1
    %s89 = scalar_select %p86, %s87, %s88
    %p92 = pneg %p86
    %p93 = scmp.eq.s32.totalorder %s13, 1
    %p94 = por %p92, %p93
    %p95 = scmp.ne.s32.totalorder %s87, %s90
    %p96 = scmp.eq.s32.totalorder %s13, 0
    %p97 = por %p95, %p96
    %p98 = scmp.ne.s32.totalorder %s87, %s90
    %p99 = scmp.eq.s32.totalorder %s18, 1
    %p100 = por %p98, %p99
    %p101 = scmp.ne.s32.totalorder %s90, %s91
    %p102 = scmp.eq.s32.totalorder %s18, 0
    %p103 = por %p101, %p102
    %p104 = scmp.ne.s32.totalorder %s90, %s91
    %p105 = scmp.eq.s32.totalorder %s19, 1
    %p106 = por %p104, %p105
    %p108 = scmp.ne.s32.totalorder %s91, %s107
    %p109 = scmp.eq.s32.totalorder %s19, 0
    %p110 = por %p108, %p109
    %s111 = ssub.s32 %s20, %s32
    %p112 = scmp.eq.s32.totalorder %s111, 0
    %s114 = sadd.s32 %s113, 1
    %s115 = scalar_select %p112, %s113, %s114
    %p118 = pneg %p112
    %p119 = scmp.eq.s32.totalorder %s13, 1
    %p120 = por %p118, %p119
    %p121 = scmp.ne.s32.totalorder %s113, %s116
    %p122 = scmp.eq.s32.totalorder %s13, 0
    %p123 = por %p121, %p122
    %p124 = scmp.ne.s32.totalorder %s113, %s116
    %p125 = scmp.eq.s32.totalorder %s18, 1
    %p126 = por %p124, %p125
    %p127 = scmp.ne.s32.totalorder %s116, %s117
    %p128 = scmp.eq.s32.totalorder %s18, 0
    %p129 = por %p127, %p128
    %p130 = scmp.ne.s32.totalorder %s116, %s117
    %p131 = scmp.eq.s32.totalorder %s19, 1
    %p132 = por %p130, %p131
    %p134 = scmp.ne.s32.totalorder %s117, %s133
    %p135 = scmp.eq.s32.totalorder %s19, 0
    %p136 = por %p134, %p135
    %s138 = sadd.s32 %s137, 1
    %p141 = scmp.eq.s32.totalorder %s13, 1
    %p142 = scmp.ne.s32.totalorder %s137, %s139
    %p143 = scmp.eq.s32.totalorder %s13, 0
    %p144 = por %p142, %p143
    %p145 = scmp.ne.s32.totalorder %s137, %s139
    %p146 = scmp.eq.s32.totalorder %s18, 1
    %p147 = por %p145, %p146
    %p148 = scmp.ne.s32.totalorder %s139, %s140
    %p149 = scmp.eq.s32.totalorder %s18, 0
    %p150 = por %p148, %p149
    %p151 = scmp.ne.s32.totalorder %s139, %s140
    %p152 = scmp.eq.s32.totalorder %s19, 1
    %p153 = por %p151, %p152
    %p155 = scmp.ne.s32.totalorder %s140, %s154
    %p156 = scmp.eq.s32.totalorder %s19, 0
    %p157 = por %p155, %p156
    %s159 = sadd.s32 %s158, 1
    %p162 = scmp.eq.s32.totalorder %s13, 1
    %p163 = scmp.ne.s32.totalorder %s158, %s160
    %p164 = scmp.eq.s32.totalorder %s13, 0
    %p165 = por %p163, %p164
    %p166 = scmp.ne.s32.totalorder %s158, %s160
    %p167 = scmp.eq.s32.totalorder %s18, 1
    %p168 = por %p166, %p167
    %p169 = scmp.ne.s32.totalorder %s160, %s161
    %p170 = scmp.eq.s32.totalorder %s18, 0
    %p171 = por %p169, %p170
    %p172 = scmp.ne.s32.totalorder %s160, %s161
    %p173 = scmp.eq.s32.totalorder %s19, 1
    %p174 = por %p172, %p173
    %p176 = scmp.ne.s32.totalorder %s161, %s175
    %p177 = scmp.eq.s32.totalorder %s19, 0
    %p178 = por %p176, %p177
    %s180 = sadd.s32 %s179, 1
    %p183 = scmp.eq.s32.totalorder %s13, 1
    %p184 = scmp.ne.s32.totalorder %s179, %s181
    %p185 = scmp.eq.s32.totalorder %s13, 0
    %p186 = por %p184, %p185
    %p187 = scmp.ne.s32.totalorder %s179, %s181
    %p188 = scmp.eq.s32.totalorder %s18, 1
    %p189 = por %p187, %p188
    %p190 = scmp.ne.s32.totalorder %s181, %s182
    %p191 = scmp.eq.s32.totalorder %s18, 0
    %p192 = por %p190, %p191
    %p193 = scmp.ne.s32.totalorder %s181, %s182
    %p194 = scmp.eq.s32.totalorder %s19, 1
    %p195 = por %p193, %p194
    %p197 = scmp.ne.s32.totalorder %s182, %s196
    %p198 = scmp.eq.s32.totalorder %s19, 0
    %p199 = por %p197, %p198
    %s200 = ssub.s32 %s20, %s32
    %p201 = scmp.eq.s32.totalorder %s200, 0
    %s203 = sadd.s32 %s202, 1
    %s204 = scalar_select %p201, %s202, %s203
    %p207 = pneg %p201
    %p208 = scmp.eq.s32.totalorder %s13, 1
    %p209 = por %p207, %p208
    %p210 = scmp.ne.s32.totalorder %s202, %s205
    %p211 = scmp.eq.s32.totalorder %s13, 0
    %p212 = por %p210, %p211
    %p213 = scmp.ne.s32.totalorder %s202, %s205
    %p214 = scmp.eq.s32.totalorder %s18, 1
    %p215 = por %p213, %p214
    %p216 = scmp.ne.s32.totalorder %s205, %s206
    %p217 = scmp.eq.s32.totalorder %s18, 0
    %p218 = por %p216, %p217
    %p219 = scmp.ne.s32.totalorder %s205, %s206
    %p220 = scmp.eq.s32.totalorder %s19, 1
    %p221 = por %p219, %p220
    %p223 = scmp.ne.s32.totalorder %s206, %s222
    %p224 = scmp.eq.s32.totalorder %s19, 0
    %p225 = por %p223, %p224
    %p226 = scmp.le.s32.totalorder 1, %s13
    %p227 = scmp.lt.s32.totalorder %s13, 3
    %p228 = pnand %p226, %p227
    %p229 = pneg %p228
    // Predicated region
    $region9: #{sage_forward.5} parent=5 // pred_check
      _
    $region10: #{sage_forward.5} parent=5 // pred_check_branch
      %231 = sbr.rel (%p228) target = $region12
    $region11: #{sage_forward.5} parent=5 // pred_region
      %s232 = ssub.s32 %s13, 1
      // Predicated region
      $region13: #{sage_forward.5} parent=11 // pred_check
        %p233 = pneg %p103
      $region14: #{sage_forward.5} parent=11 // pred_check_branch
        %235 = sbr.rel (%p233) target = $region16
      $region15: #{sage_forward.5} parent=11 // pred_region
        %s236 = smul.u32 16, %s22
        %p237 = scmp.lt.s32.totalorder %s236, 15
        %s238 = scalar_select %p237, %s236, 15
        %s239 = smul.addr %s238, 8
        %s240 = scalar_lea.vmem %s2, %s239
        %s241 = smul.u32 16, %s22
      $region16: #{sage_forward.5} parent=11 // pred_fallthru
        _
      // Predicated region
      $region17: #{sage_forward.5} parent=11 // pred_check
        %p242 = pneg %p129
      $region18: #{sage_forward.5} parent=11 // pred_check_branch
        %244 = sbr.rel (%p242) target = $region20
      $region19: #{sage_forward.5} parent=11 // pred_region
        %s245 = smul.u32 16, %s22
        %p246 = scmp.lt.s32.totalorder %s245, 15
        %s247 = scalar_select %p246, %s245, 15
        %s248 = smul.addr %s247, 8
        %s249 = scalar_lea.vmem %s3, %s248
        %s250 = smul.u32 16, %s22
      $region20: #{sage_forward.5} parent=11 // pred_fallthru
        _
      // Predicated region
      $region21: #{sage_forward.5} parent=11 // pred_check
        %p251 = pneg %p150
      $region22: #{sage_forward.5} parent=11 // pred_check_branch
        %253 = sbr.rel (%p251) target = $region24
      $region23: #{sage_forward.5} parent=11 // pred_region
        _
      $region24: #{sage_forward.5} parent=11 // pred_fallthru
        _
      // Predicated region
      $region25: #{sage_forward.5} parent=11 // pred_check
        %p254 = pneg %p171
      $region26: #{sage_forward.5} parent=11 // pred_check_branch
        %256 = sbr.rel (%p254) target = $region28
      $region27: #{sage_forward.5} parent=11 // pred_region
        _
      $region28: #{sage_forward.5} parent=11 // pred_fallthru
        _
      // Predicated region
      $region29: #{sage_forward.5} parent=11 // pred_check
        %p257 = pneg %p192
      $region30: #{sage_forward.5} parent=11 // pred_check_branch
        %259 = sbr.rel (%p257) target = $region32
      $region31: #{sage_forward.5} parent=11 // pred_region
        _
      $region32: #{sage_forward.5} parent=11 // pred_fallthru
        _
    $region12: #{sage_forward.5} parent=5 // pred_fallthru
      _
    %p260 = scmp.lt.s32.totalorder %s13, 2
    // Predicated region
    $region33: #{sage_forward.5} parent=5 // pred_check
      %p261 = pneg %p260
    $region34: #{sage_forward.5} parent=5 // pred_check_branch
      %263 = sbr.rel (%p261) target = $region36
    $region35: #{sage_forward.5} parent=5 // pred_region
      // Predicated region
      $region37: #{sage_forward.5} parent=35 // pred_check
        %p264 = pneg %p45
      $region38: #{sage_forward.5} parent=35 // pred_check_branch
        %266 = sbr.rel (%p264) target = $region40
      $region39: #{sage_forward.5} parent=35 // pred_region
        %s267 = smul.u32 2, %s21
        %p268 = scmp.lt.s32.totalorder %s267, 3
        %s269 = scalar_select %p268, %s267, 3
        %s270 = scalar_lea.vmem %s0, %s269
        %s271 = smul.u32 2, %s21
      $region40: #{sage_forward.5} parent=35 // pred_fallthru
        _
      // Predicated region
      $region41: #{sage_forward.5} parent=35 // pred_check
        %p272 = pneg %p71
      $region42: #{sage_forward.5} parent=35 // pred_check_branch
        %274 = sbr.rel (%p272) target = $region44
      $region43: #{sage_forward.5} parent=35 // pred_region
        %s275 = smul.u32 32, %s21
        %p276 = scmp.lt.s32.totalorder %s275, 63
        %s277 = scalar_select %p276, %s275, 63
        %s278 = smul.addr %s277, 8
        %s279 = scalar_lea.vmem %s1, %s278
        %s280 = smul.u32 32, %s21
      $region44: #{sage_forward.5} parent=35 // pred_fallthru
        _
    $region36: #{sage_forward.5} parent=5 // pred_fallthru
      _
    %p281 = scmp.le.s32.totalorder 1, %s13
    %p282 = scmp.lt.s32.totalorder %s13, 3
    %p283 = pnand %p281, %p282
    %p284 = pneg %p283
    // Predicated region
    $region45: #{sage_forward.5} parent=5 // pred_check
      _
    $region46: #{sage_forward.5} parent=5 // pred_check_branch
      %286 = sbr.rel (%p283) target = $region48
    $region47: #{sage_forward.5} parent=5 // pred_region
      %s287 = ssub.s32 %s13, 1
      %s288 = smul.u32 2, %s23
      %p289 = scmp.lt.s32.totalorder %s288, 3
      %s290 = scalar_select %p289, %s288, 3
      %s291 = scalar_lea.vmem %s0, %s290
      %p292 = pneg %p51
      %p293 = pneg %p48
      %s294 = smul.u32 32, %s23
      %p295 = scmp.lt.s32.totalorder %s294, 63
      %s296 = scalar_select %p295, %s294, 63
      %s297 = smul.addr %s296, 8
      %s298 = scalar_lea.vmem %s1, %s297
      %p299 = pneg %p77
      %p300 = pneg %p74
      %s301 = smul.u32 16, %s22
      %p302 = scmp.lt.s32.totalorder %s301, 15
      %s303 = scalar_select %p302, %s301, 15
      %s304 = smul.addr %s303, 8
      %s305 = scalar_lea.vmem %s2, %s304
      %p306 = pneg %p103
      %p307 = pneg %p100
      %s308 = smul.u32 16, %s22
      %p309 = scmp.lt.s32.totalorder %s308, 15
      %s310 = scalar_select %p309, %s308, 15
      %s311 = smul.addr %s310, 8
      %s312 = scalar_lea.vmem %s3, %s311
      %p313 = pneg %p129
      %p314 = pneg %p126
      %p315 = pneg %p150
      %p316 = pneg %p147
      %p317 = pneg %p171
      %p318 = pneg %p168
      %p319 = pneg %p192
      %p320 = pneg %p189
      %p321 = pneg %p218
      %p322 = pneg %p215
      %s323 = smul.u32 16, %s22
      %p324 = scmp.lt.s32.totalorder %s323, 15
      %s325 = scalar_select %p324, %s323, 15
      %s326 = smul.addr %s325, 8
      %s327 = scalar_lea.vmem %s7, %s326
      %s328 = smul.u32 2, %s23
      %p329 = scmp.lt.s32.totalorder %s328, 3
      %s330 = scalar_select %p329, %s328, 3
      %s331 = scalar_lea.vmem %s0, %s330
      %s332 = smul.u32 2, %s23
      %s333 = smul.u32 32, %s23
      %p334 = scmp.lt.s32.totalorder %s333, 63
      %s335 = scalar_select %p334, %s333, 63
      %s336 = smul.addr %s335, 8
      %s337 = scalar_lea.vmem %s1, %s336
      %s338 = smul.u32 32, %s23
      %s339 = smul.u32 16, %s22
      %p340 = scmp.lt.s32.totalorder %s339, 15
      %s341 = scalar_select %p340, %s339, 15
      %s342 = smul.addr %s341, 8
      %s343 = scalar_lea.vmem %s2, %s342
      %s344 = smul.u32 16, %s22
      %s345 = smul.u32 16, %s22
      %p346 = scmp.lt.s32.totalorder %s345, 15
      %s347 = scalar_select %p346, %s345, 15
      %s348 = smul.addr %s347, 8
      %s349 = scalar_lea.vmem %s3, %s348
      %s350 = smul.u32 16, %s22
      %s351 = smul.u32 16, %s22
      %p352 = scmp.lt.s32.totalorder %s351, 15
      %s353 = scalar_select %p352, %s351, 15
      %s354 = smul.addr %s353, 8
      %s355 = scalar_lea.vmem %s7, %s354
      %s356 = smul.u32 16, %s22
      %p357 = scmp.eq.s32.totalorder %s23, 0
      // Predicated region
      $region49: #{sage_forward.5} parent=47 // pred_check
        %p358 = pneg %p357
      $region50: #{sage_forward.5} parent=47 // pred_check_branch
        %360 = sbr.rel (%p358) target = $region52
      $region51: #{sage_forward.5} parent=47 // pred_region
        %361 = vst [vmem:[#allocation2] sm:$0xff] 0.0
        %362 = vst [vmem:[#allocation2 + $0x8] sm:$0xff] 0.0
        %363 = vst [vmem:[#allocation2 + $0x10] sm:$0xff] 0.0
        %364 = vst [vmem:[#allocation2 + $0x18] sm:$0xff] 0.0
        %365 = vst [vmem:[#allocation2 + $0x20] sm:$0xff] 0.0
        %366 = vst [vmem:[#allocation2 + $0x28] sm:$0xff] 0.0
        %367 = vst [vmem:[#allocation2 + $0x30] sm:$0xff] 0.0
        %368 = vst [vmem:[#allocation2 + $0x38] sm:$0xff] 0.0
        %369 = vst [vmem:[#allocation2 + $0x40] sm:$0xff] 0.0
        %370 = vst [vmem:[#allocation2 + $0x48] sm:$0xff] 0.0
        %371 = vst [vmem:[#allocation2 + $0x50] sm:$0xff] 0.0
        %372 = vst [vmem:[#allocation2 + $0x58] sm:$0xff] 0.0
        %373 = vst [vmem:[#allocation2 + $0x60] sm:$0xff] 0.0
        %374 = vst [vmem:[#allocation2 + $0x68] sm:$0xff] 0.0
        %375 = vst [vmem:[#allocation2 + $0x70] sm:$0xff] 0.0
        %376 = vst [vmem:[#allocation2 + $0x78] sm:$0xff] 0.0
      $region52: #{sage_forward.5} parent=47 // pred_fallthru
        _
      %s377 = smul.u32 %s22, 128
      %v378 = vlaneseq
      %v379 = vshrl.u32 %v378, 7
      %v380 = vadd.s32 %v379, 8
      %v381 = vadd.s32 %v379, 16
      %v382 = vadd.s32 %v379, 24
      %v383 = vadd.s32 %v379, 32
      %v384 = vadd.s32 %v379, 40
      %v385 = vadd.s32 %v379, 48
      %v386 = vadd.s32 %v379, 56
      %v387 = vadd.s32 %v379, 64
      %v388 = vadd.s32 %v379, 72
      %v389 = vadd.s32 %v379, 80
      %v390 = vadd.s32 %v379, 88
      %v391 = vadd.s32 %v379, 96
      %v392 = vadd.s32 %v379, 104
      %v393 = vadd.s32 %v379, 112
      %v394 = vadd.s32 %v379, 120
      %v395 = vstv %s377
      %v396 = vadd.s32 %v395, %v379
      %v397 = vadd.s32 %v395, %v380
      %v398 = vadd.s32 %v395, %v381
      %v399 = vadd.s32 %v395, %v382
      %v400 = vadd.s32 %v395, %v383
      %v401 = vadd.s32 %v395, %v384
      %v402 = vadd.s32 %v395, %v385
      %v403 = vadd.s32 %v395, %v386
      %v404 = vadd.s32 %v395, %v387
      %v405 = vadd.s32 %v395, %v388
      %v406 = vadd.s32 %v395, %v389
      %v407 = vadd.s32 %v395, %v390
      %v408 = vadd.s32 %v395, %v391
      %v409 = vadd.s32 %v395, %v392
      %v410 = vadd.s32 %v395, %v393
      %v411 = vadd.s32 %v395, %v394
      %v412 = vld [vmem:[%s331] sm:$0x3]
      %v413 = vlaneseq
      %v414 = vshrl.u32 %v413, 7
      %v415 = vsub.s32 0, %v414
      %v416 = vrot.slane %v412, %v415
      %v417 = vlaneseq
      %v418 = vshrl.u32 %v417, 7
      %v419 = vsub.s32 1, %v418
      %v420 = vrot.slane %v412, %v419
      %vm421 = vcmp.eq.s32.totalorder %v396, %v416
      %vm422 = vcmp.eq.s32.totalorder %v396, %v420
      %vm423 = vcmp.eq.s32.totalorder %v397, %v416
      %vm424 = vcmp.eq.s32.totalorder %v397, %v420
      %vm425 = vcmp.eq.s32.totalorder %v398, %v416
      %vm426 = vcmp.eq.s32.totalorder %v398, %v420
      %vm427 = vcmp.eq.s32.totalorder %v399, %v416
      %vm428 = vcmp.eq.s32.totalorder %v399, %v420
      %vm429 = vcmp.eq.s32.totalorder %v400, %v416
      %vm430 = vcmp.eq.s32.totalorder %v400, %v420
      %vm431 = vcmp.eq.s32.totalorder %v401, %v416
      %vm432 = vcmp.eq.s32.totalorder %v401, %v420
      %vm433 = vcmp.eq.s32.totalorder %v402, %v416
      %vm434 = vcmp.eq.s32.totalorder %v402, %v420
      %vm435 = vcmp.eq.s32.totalorder %v403, %v416
      %vm436 = vcmp.eq.s32.totalorder %v403, %v420
      %vm437 = vcmp.eq.s32.totalorder %v404, %v416
      %vm438 = vcmp.eq.s32.totalorder %v404, %v420
      %vm439 = vcmp.eq.s32.totalorder %v405, %v416
      %vm440 = vcmp.eq.s32.totalorder %v405, %v420
      %vm441 = vcmp.eq.s32.totalorder %v406, %v416
      %vm442 = vcmp.eq.s32.totalorder %v406, %v420
      %vm443 = vcmp.eq.s32.totalorder %v407, %v416
      %vm444 = vcmp.eq.s32.totalorder %v407, %v420
      %vm445 = vcmp.eq.s32.totalorder %v408, %v416
      %vm446 = vcmp.eq.s32.totalorder %v408, %v420
      %vm447 = vcmp.eq.s32.totalorder %v409, %v416
      %vm448 = vcmp.eq.s32.totalorder %v409, %v420
      %vm449 = vcmp.eq.s32.totalorder %v410, %v416
      %vm450 = vcmp.eq.s32.totalorder %v410, %v420
      %vm451 = vcmp.eq.s32.totalorder %v411, %v416
      %vm452 = vcmp.eq.s32.totalorder %v411, %v420
      %v453 = vsel %vm421, 1, 0
      %v454 = vsel %vm422, 1, 0
      %v455 = vsel %vm423, 1, 0
      %v456 = vsel %vm424, 1, 0
      %v457 = vsel %vm425, 1, 0
      %v458 = vsel %vm426, 1, 0
      %v459 = vsel %vm427, 1, 0
      %v460 = vsel %vm428, 1, 0
      %v461 = vsel %vm429, 1, 0
      %v462 = vsel %vm430, 1, 0
      %v463 = vsel %vm431, 1, 0
      %v464 = vsel %vm432, 1, 0
      %v465 = vsel %vm433, 1, 0
      %v466 = vsel %vm434, 1, 0
      %v467 = vsel %vm435, 1, 0
      %v468 = vsel %vm436, 1, 0
      %v469 = vsel %vm437, 1, 0
      %v470 = vsel %vm438, 1, 0
      %v471 = vsel %vm439, 1, 0
      %v472 = vsel %vm440, 1, 0
      %v473 = vsel %vm441, 1, 0
      %v474 = vsel %vm442, 1, 0
      %v475 = vsel %vm443, 1, 0
      %v476 = vsel %vm444, 1, 0
      %v477 = vsel %vm445, 1, 0
      %v478 = vsel %vm446, 1, 0
      %v479 = vsel %vm447, 1, 0
      %v480 = vsel %vm448, 1, 0
      %v481 = vsel %vm449, 1, 0
      %v482 = vsel %vm450, 1, 0
      %v483 = vsel %vm451, 1, 0
      %v484 = vsel %vm452, 1, 0
      %v485 = vcvt.s32.f32 %v453
      %v486 = vcvt.s32.f32 %v454
      %v487 = vcvt.s32.f32 %v455
      %v488 = vcvt.s32.f32 %v456
      %v489 = vcvt.s32.f32 %v457
      %v490 = vcvt.s32.f32 %v458
      %v491 = vcvt.s32.f32 %v459
      %v492 = vcvt.s32.f32 %v460
      %v493 = vcvt.s32.f32 %v461
      %v494 = vcvt.s32.f32 %v462
      %v495 = vcvt.s32.f32 %v463
      %v496 = vcvt.s32.f32 %v464
      %v497 = vcvt.s32.f32 %v465
      %v498 = vcvt.s32.f32 %v466
      %v499 = vcvt.s32.f32 %v467
      %v500 = vcvt.s32.f32 %v468
      %v501 = vcvt.s32.f32 %v469
      %v502 = vcvt.s32.f32 %v470
      %v503 = vcvt.s32.f32 %v471
      %v504 = vcvt.s32.f32 %v472
      %v505 = vcvt.s32.f32 %v473
      %v506 = vcvt.s32.f32 %v474
      %v507 = vcvt.s32.f32 %v475
      %v508 = vcvt.s32.f32 %v476
      %v509 = vcvt.s32.f32 %v477
      %v510 = vcvt.s32.f32 %v478
      %v511 = vcvt.s32.f32 %v479
      %v512 = vcvt.s32.f32 %v480
      %v513 = vcvt.s32.f32 %v481
      %v514 = vcvt.s32.f32 %v482
      %v515 = vcvt.s32.f32 %v483
      %v516 = vcvt.s32.f32 %v484
      %v517 = vld [vmem:[#allocation2] sm:$0xff]
      %v518 = vld [vmem:[#allocation2 + $0x8] sm:$0xff]
      %v519 = vld [vmem:[#allocation2 + $0x10] sm:$0xff]
      %v520 = vld [vmem:[#allocation2 + $0x18] sm:$0xff]
      %v521 = vld [vmem:[#allocation2 + $0x20] sm:$0xff]
      %v522 = vld [vmem:[#allocation2 + $0x28] sm:$0xff]
      %v523 = vld [vmem:[#allocation2 + $0x30] sm:$0xff]
      %v524 = vld [vmem:[#allocation2 + $0x38] sm:$0xff]
      %v525 = vld [vmem:[#allocation2 + $0x40] sm:$0xff]
      %v526 = vld [vmem:[#allocation2 + $0x48] sm:$0xff]
      %v527 = vld [vmem:[#allocation2 + $0x50] sm:$0xff]
      %v528 = vld [vmem:[#allocation2 + $0x58] sm:$0xff]
      %v529 = vld [vmem:[#allocation2 + $0x60] sm:$0xff]
      %v530 = vld [vmem:[#allocation2 + $0x68] sm:$0xff]
      %v531 = vld [vmem:[#allocation2 + $0x70] sm:$0xff]
      %v532 = vld [vmem:[#allocation2 + $0x78] sm:$0xff]
      %v533 = vld [vmem:[%s337] sm:$0xff]
      %v534 = vld [vmem:[%s337 + $0x8] sm:$0xff]
      %v535 = vld [vmem:[%s337 + $0x10] sm:$0xff]
      %v536 = vld [vmem:[%s337 + $0x18] sm:$0xff]
      %v537 = vld [vmem:[%s337 + $0x20] sm:$0xff]
      %v538 = vld [vmem:[%s337 + $0x28] sm:$0xff]
      %v539 = vld [vmem:[%s337 + $0x30] sm:$0xff]
      %v540 = vld [vmem:[%s337 + $0x38] sm:$0xff]
      %v541 = vld [vmem:[%s337 + $0x40] sm:$0xff]
      %v542 = vld [vmem:[%s337 + $0x48] sm:$0xff]
      %v543 = vld [vmem:[%s337 + $0x50] sm:$0xff]
      %v544 = vld [vmem:[%s337 + $0x58] sm:$0xff]
      %v545 = vld [vmem:[%s337 + $0x60] sm:$0xff]
      %v546 = vld [vmem:[%s337 + $0x68] sm:$0xff]
      %v547 = vld [vmem:[%s337 + $0x70] sm:$0xff]
      %v548 = vld [vmem:[%s337 + $0x78] sm:$0xff]
      %v549 = vld [vmem:[%s337 + $0x80] sm:$0xff]
      %v550 = vld [vmem:[%s337 + $0x88] sm:$0xff]
      %v551 = vld [vmem:[%s337 + $0x90] sm:$0xff]
      %v552 = vld [vmem:[%s337 + $0x98] sm:$0xff]
      %v553 = vld [vmem:[%s337 + $0xa0] sm:$0xff]
      %v554 = vld [vmem:[%s337 + $0xa8] sm:$0xff]
      %v555 = vld [vmem:[%s337 + $0xb0] sm:$0xff]
      %v556 = vld [vmem:[%s337 + $0xb8] sm:$0xff]
      %v557 = vld [vmem:[%s337 + $0xc0] sm:$0xff]
      %v558 = vld [vmem:[%s337 + $0xc8] sm:$0xff]
      %v559 = vld [vmem:[%s337 + $0xd0] sm:$0xff]
      %v560 = vld [vmem:[%s337 + $0xd8] sm:$0xff]
      %v561 = vld [vmem:[%s337 + $0xe0] sm:$0xff]
      %v562 = vld [vmem:[%s337 + $0xe8] sm:$0xff]
      %v563 = vld [vmem:[%s337 + $0xf0] sm:$0xff]
      %v564 = vld [vmem:[%s337 + $0xf8] sm:$0xff]
      %565 = vmatprep.subr.mxu0 0.0
      %566 = vmatpush1.msra.mxu0 %v533
      %567 = vmatprep.subr.mxu0 0.0
      %568 = vmatpush1.msra.mxu0 %v534
      %569 = vmatprep.subr.mxu0 0.0
      %570 = vmatpush1.msra.mxu0 %v535
      %571 = vmatprep.subr.mxu0 0.0
      %572 = vmatpush1.msra.mxu0 %v536
      %573 = vmatprep.subr.mxu0 0.0
      %574 = vmatpush1.msra.mxu0 %v537
      %575 = vmatprep.subr.mxu0 0.0
      %576 = vmatpush1.msra.mxu0 %v538
      %577 = vmatprep.subr.mxu0 0.0
      %578 = vmatpush1.msra.mxu0 %v539
      %579 = vmatprep.subr.mxu0 0.0
      %580 = vmatpush1.msra.mxu0 %v540
      %581 = vmatprep.subr.mxu0 0.0
      %582 = vmatpush1.msra.mxu0 %v541
      %583 = vmatprep.subr.mxu0 0.0
      %584 = vmatpush1.msra.mxu0 %v542
      %585 = vmatprep.subr.mxu0 0.0
      %586 = vmatpush1.msra.mxu0 %v543
      %587 = vmatprep.subr.mxu0 0.0
      %588 = vmatpush1.msra.mxu0 %v544
      %589 = vmatprep.subr.mxu0 0.0
      %590 = vmatpush1.msra.mxu0 %v545
      %591 = vmatprep.subr.mxu0 0.0
      %592 = vmatpush1.msra.mxu0 %v546
      %593 = vmatprep.subr.mxu0 0.0
      %594 = vmatpush1.msra.mxu0 %v547
      %595 = vmatprep.subr.mxu0 0.0
      %596 = vmatpush1.msra.mxu0 %v548
      %597 = vmatprep.subr.mxu0 0.0
      %598 = vmatpush1.msra.mxu0 %v549
      %599 = vmatprep.subr.mxu0 0.0
      %600 = vmatpush1.msra.mxu0 %v550
      %601 = vmatprep.subr.mxu0 0.0
      %602 = vmatpush1.msra.mxu0 %v551
      %603 = vmatprep.subr.mxu0 0.0
      %604 = vmatpush1.msra.mxu0 %v552
      %605 = vmatprep.subr.mxu0 0.0
      %606 = vmatpush1.msra.mxu0 %v553
      %607 = vmatprep.subr.mxu0 0.0
      %608 = vmatpush1.msra.mxu0 %v554
      %609 = vmatprep.subr.mxu0 0.0
      %610 = vmatpush1.msra.mxu0 %v555
      %611 = vmatprep.subr.mxu0 0.0
      %612 = vmatpush1.msra.mxu0 %v556
      %613 = vmatprep.subr.mxu0 0.0
      %614 = vmatpush1.msra.mxu0 %v557
      %615 = vmatprep.subr.mxu0 0.0
      %616 = vmatpush1.msra.mxu0 %v558
      %617 = vmatprep.subr.mxu0 0.0
      %618 = vmatpush1.msra.mxu0 %v559
      %619 = vmatprep.subr.mxu0 0.0
      %620 = vmatpush1.msra.mxu0 %v560
      %621 = vmatprep.subr.mxu0 0.0
      %622 = vmatpush1.msra.mxu0 %v561
      %623 = vmatprep.subr.mxu0 0.0
      %624 = vmatpush1.msra.mxu0 %v562
      %625 = vmatprep.subr.mxu0 0.0
      %626 = vmatpush1.msra.mxu0 %v563
      %627 = vmatprep.subr.mxu0 0.0
      %628 = vmatpush1.msra.mxu0 %v564
      %629 = vmatprep.mubr.f32.mxu0 %v486
      %630 = vmatmul.mubr.f32.gmra.mrb[0].mxu0 %v485
      %v631 = vpop.f32.mrb[0].mxu0
      %v632 = vadd.f32 0.0, %v631
      %v633 = vpop.f32.mrb[0].mxu0
      %634 = vmatprep.mubr.f32.mxu0 %v488
      %635 = vmatmul.mubr.f32.gmra.mrb[0].mxu0 %v487
      %v636 = vpop.f32.mrb[0].mxu0
      %v637 = vadd.f32 0.0, %v636
      %v638 = vpop.f32.mrb[0].mxu0
      %639 = vmatprep.mubr.f32.mxu0 %v490
      %640 = vmatmul.mubr.f32.gmra.mrb[0].mxu0 %v489
      %v641 = vpop.f32.mrb[0].mxu0
      %v642 = vadd.f32 0.0, %v641
      %v643 = vpop.f32.mrb[0].mxu0
      %644 = vmatprep.mubr.f32.mxu0 %v492
      %645 = vmatmul.mubr.f32.gmra.mrb[0].mxu0 %v491
      %v646 = vpop.f32.mrb[0].mxu0
      %v647 = vadd.f32 0.0, %v646
      %v648 = vpop.f32.mrb[0].mxu0
      %649 = vmatprep.mubr.f32.mxu0 %v494
      %650 = vmatmul.mubr.f32.gmra.mrb[0].mxu0 %v493
      %v651 = vpop.f32.mrb[0].mxu0
      %v652 = vadd.f32 0.0, %v651
      %v653 = vpop.f32.mrb[0].mxu0
      %654 = vmatprep.mubr.f32.mxu0 %v496
      %655 = vmatmul.mubr.f32.gmra.mrb[0].mxu0 %v495
      %v656 = vpop.f32.mrb[0].mxu0
      %v657 = vadd.f32 0.0, %v656
      %v658 = vpop.f32.mrb[0].mxu0
      %659 = vmatprep.mubr.f32.mxu0 %v498
      %660 = vmatmul.mubr.f32.gmra.mrb[0].mxu0 %v497
      %v661 = vpop.f32.mrb[0].mxu0
      %v662 = vadd.f32 0.0, %v661
      %v663 = vpop.f32.mrb[0].mxu0
      %664 = vmatprep.mubr.f32.mxu0 %v500
      %665 = vmatmul.mubr.f32.gmra.mrb[0].mxu0 %v499
      %v666 = vpop.f32.mrb[0].mxu0
      %v667 = vadd.f32 0.0, %v666
      %v668 = vpop.f32.mrb[0].mxu0
      %669 = vmatprep.mubr.f32.mxu0 %v502
      %670 = vmatmul.mubr.f32.gmra.mrb[0].mxu0 %v501
      %v671 = vpop.f32.mrb[0].mxu0
      %v672 = vadd.f32 0.0, %v671
      %v673 = vpop.f32.mrb[0].mxu0
      %674 = vmatprep.mubr.f32.mxu0 %v504
      %675 = vmatmul.mubr.f32.gmra.mrb[0].mxu0 %v503
      %v676 = vpop.f32.mrb[0].mxu0
      %v677 = vadd.f32 0.0, %v676
      %v678 = vpop.f32.mrb[0].mxu0
      %679 = vmatprep.mubr.f32.mxu0 %v506
      %680 = vmatmul.mubr.f32.gmra.mrb[0].mxu0 %v505
      %v681 = vpop.f32.mrb[0].mxu0
      %v682 = vadd.f32 0.0, %v681
      %v683 = vpop.f32.mrb[0].mxu0
      %684 = vmatprep.mubr.f32.mxu0 %v508
      %685 = vmatmul.mubr.f32.gmra.mrb[0].mxu0 %v507
      %v686 = vpop.f32.mrb[0].mxu0
      %v687 = vadd.f32 0.0, %v686
      %v688 = vpop.f32.mrb[0].mxu0
      %689 = vmatprep.mubr.f32.mxu0 %v510
      %690 = vmatmul.mubr.f32.gmra.mrb[0].mxu0 %v509
      %v691 = vpop.f32.mrb[0].mxu0
      %v692 = vadd.f32 0.0, %v691
      %v693 = vpop.f32.mrb[0].mxu0
      %694 = vmatprep.mubr.f32.mxu0 %v512
      %695 = vmatmul.mubr.f32.gmra.mrb[0].mxu0 %v511
      %v696 = vpop.f32.mrb[0].mxu0
      %v697 = vadd.f32 0.0, %v696
      %v698 = vpop.f32.mrb[0].mxu0
      %699 = vmatprep.mubr.f32.mxu0 %v514
      %700 = vmatmul.mubr.f32.gmra.mrb[0].mxu0 %v513
      %v701 = vpop.f32.mrb[0].mxu0
      %v702 = vadd.f32 0.0, %v701
      %v703 = vpop.f32.mrb[0].mxu0
      %704 = vmatprep.mubr.f32.mxu0 %v516
      %705 = vmatmul.mubr.f32.gmra.mrb[0].mxu0 %v515
      %v706 = vpop.f32.mrb[0].mxu0
      %v707 = vadd.f32 0.0, %v706
      %v708 = vpop.f32.mrb[0].mxu0
      %709 = vdwg.mxu0
      %v710 = vadd.f32 %v517, %v632
      %v711 = vadd.f32 %v518, %v637
      %v712 = vadd.f32 %v519, %v642
      %v713 = vadd.f32 %v520, %v647
      %v714 = vadd.f32 %v521, %v652
      %v715 = vadd.f32 %v522, %v657
      %v716 = vadd.f32 %v523, %v662
      %v717 = vadd.f32 %v524, %v667
      %v718 = vadd.f32 %v525, %v672
      %v719 = vadd.f32 %v526, %v677
      %v720 = vadd.f32 %v527, %v682
      %v721 = vadd.f32 %v528, %v687
      %v722 = vadd.f32 %v529, %v692
      %v723 = vadd.f32 %v530, %v697
      %v724 = vadd.f32 %v531, %v702
      %v725 = vadd.f32 %v532, %v707
      %726 = vst [vmem:[#allocation2] sm:$0xff] %v710
      %727 = vst [vmem:[#allocation2 + $0x8] sm:$0xff] %v711
      %728 = vst [vmem:[#allocation2 + $0x10] sm:$0xff] %v712
      %729 = vst [vmem:[#allocation2 + $0x18] sm:$0xff] %v713
      %730 = vst [vmem:[#allocation2 + $0x20] sm:$0xff] %v714
      %731 = vst [vmem:[#allocation2 + $0x28] sm:$0xff] %v715
      %732 = vst [vmem:[#allocation2 + $0x30] sm:$0xff] %v716
      %733 = vst [vmem:[#allocation2 + $0x38] sm:$0xff] %v717
      %734 = vst [vmem:[#allocation2 + $0x40] sm:$0xff] %v718
      %735 = vst [vmem:[#allocation2 + $0x48] sm:$0xff] %v719
      %736 = vst [vmem:[#allocation2 + $0x50] sm:$0xff] %v720
      %737 = vst [vmem:[#allocation2 + $0x58] sm:$0xff] %v721
      %738 = vst [vmem:[#allocation2 + $0x60] sm:$0xff] %v722
      %739 = vst [vmem:[#allocation2 + $0x68] sm:$0xff] %v723
      %740 = vst [vmem:[#allocation2 + $0x70] sm:$0xff] %v724
      %741 = vst [vmem:[#allocation2 + $0x78] sm:$0xff] %v725
      %p742 = scmp.eq.s32.totalorder %s23, 1
      // Predicated region
      $region53: #{sage_forward.5} parent=47 // pred_check
        %p743 = pneg %p742
      $region54: #{sage_forward.5} parent=47 // pred_check_branch
        %745 = sbr.rel (%p743) target = $region56
      $region55: #{sage_forward.5} parent=47 // pred_region
        %v746 = vld [vmem:[#allocation2] sm:$0xff]
        %v747 = vld [vmem:[#allocation2 + $0x8] sm:$0xff]
        %v748 = vld [vmem:[#allocation2 + $0x10] sm:$0xff]
        %v749 = vld [vmem:[#allocation2 + $0x18] sm:$0xff]
        %v750 = vld [vmem:[#allocation2 + $0x20] sm:$0xff]
        %v751 = vld [vmem:[#allocation2 + $0x28] sm:$0xff]
        %v752 = vld [vmem:[#allocation2 + $0x30] sm:$0xff]
        %v753 = vld [vmem:[#allocation2 + $0x38] sm:$0xff]
        %v754 = vld [vmem:[#allocation2 + $0x40] sm:$0xff]
        %v755 = vld [vmem:[#allocation2 + $0x48] sm:$0xff]
        %v756 = vld [vmem:[#allocation2 + $0x50] sm:$0xff]
        %v757 = vld [vmem:[#allocation2 + $0x58] sm:$0xff]
        %v758 = vld [vmem:[#allocation2 + $0x60] sm:$0xff]
        %v759 = vld [vmem:[#allocation2 + $0x68] sm:$0xff]
        %v760 = vld [vmem:[#allocation2 + $0x70] sm:$0xff]
        %v761 = vld [vmem:[#allocation2 + $0x78] sm:$0xff]
        %v762 = vld [vmem:[%s349] sm:$0xff]
        %v763 = vld [vmem:[%s349 + $0x8] sm:$0xff]
        %v764 = vld [vmem:[%s349 + $0x10] sm:$0xff]
        %v765 = vld [vmem:[%s349 + $0x18] sm:$0xff]
        %v766 = vld [vmem:[%s349 + $0x20] sm:$0xff]
        %v767 = vld [vmem:[%s349 + $0x28] sm:$0xff]
        %v768 = vld [vmem:[%s349 + $0x30] sm:$0xff]
        %v769 = vld [vmem:[%s349 + $0x38] sm:$0xff]
        %v770 = vld [vmem:[%s349 + $0x40] sm:$0xff]
        %v771 = vld [vmem:[%s349 + $0x48] sm:$0xff]
        %v772 = vld [vmem:[%s349 + $0x50] sm:$0xff]
        %v773 = vld [vmem:[%s349 + $0x58] sm:$0xff]
        %v774 = vld [vmem:[%s349 + $0x60] sm:$0xff]
        %v775 = vld [vmem:[%s349 + $0x68] sm:$0xff]
        %v776 = vld [vmem:[%s349 + $0x70] sm:$0xff]
        %v777 = vld [vmem:[%s349 + $0x78] sm:$0xff]
        %779 = vset.pattern.permute.xlu0 0
        %780 = vperm.xlu0 %779, %v762
        %v781 = vpop.permute.xlu0 %780
        %784 = vset.pattern.permute.xlu0 0
        %785 = vperm.xlu0 %784, %v763
        %v786 = vpop.permute.xlu0 %785
        %789 = vset.pattern.permute.xlu0 0
        %790 = vperm.xlu0 %789, %v764
        %v791 = vpop.permute.xlu0 %790
        %794 = vset.pattern.permute.xlu0 0
        %795 = vperm.xlu0 %794, %v765
        %v796 = vpop.permute.xlu0 %795
        %799 = vset.pattern.permute.xlu0 0
        %800 = vperm.xlu0 %799, %v766
        %v801 = vpop.permute.xlu0 %800
        %804 = vset.pattern.permute.xlu0 0
        %805 = vperm.xlu0 %804, %v767
        %v806 = vpop.permute.xlu0 %805
        %809 = vset.pattern.permute.xlu0 0
        %810 = vperm.xlu0 %809, %v768
        %v811 = vpop.permute.xlu0 %810
        %814 = vset.pattern.permute.xlu0 0
        %815 = vperm.xlu0 %814, %v769
        %v816 = vpop.permute.xlu0 %815
        %819 = vset.pattern.permute.xlu0 0
        %820 = vperm.xlu0 %819, %v770
        %v821 = vpop.permute.xlu0 %820
        %824 = vset.pattern.permute.xlu0 0
        %825 = vperm.xlu0 %824, %v771
        %v826 = vpop.permute.xlu0 %825
        %829 = vset.pattern.permute.xlu0 0
        %830 = vperm.xlu0 %829, %v772
        %v831 = vpop.permute.xlu0 %830
        %834 = vset.pattern.permute.xlu0 0
        %835 = vperm.xlu0 %834, %v773
        %v836 = vpop.permute.xlu0 %835
        %839 = vset.pattern.permute.xlu0 0
        %840 = vperm.xlu0 %839, %v774
        %v841 = vpop.permute.xlu0 %840
        %844 = vset.pattern.permute.xlu0 0
        %845 = vperm.xlu0 %844, %v775
        %v846 = vpop.permute.xlu0 %845
        %849 = vset.pattern.permute.xlu0 0
        %850 = vperm.xlu0 %849, %v776
        %v851 = vpop.permute.xlu0 %850
        %854 = vset.pattern.permute.xlu0 0
        %855 = vperm.xlu0 %854, %v777
        %v856 = vpop.permute.xlu0 %855
        %v858 = vmul.f32 %v746, %v781
        %v859 = vmul.f32 %v747, %v786
        %v860 = vmul.f32 %v748, %v791
        %v861 = vmul.f32 %v749, %v796
        %v862 = vmul.f32 %v750, %v801
        %v863 = vmul.f32 %v751, %v806
        %v864 = vmul.f32 %v752, %v811
        %v865 = vmul.f32 %v753, %v816
        %v866 = vmul.f32 %v754, %v821
        %v867 = vmul.f32 %v755, %v826
        %v868 = vmul.f32 %v756, %v831
        %v869 = vmul.f32 %v757, %v836
        %v870 = vmul.f32 %v758, %v841
        %v871 = vmul.f32 %v759, %v846
        %v872 = vmul.f32 %v760, %v851
        %v873 = vmul.f32 %v761, %v856
        %v874 = vld [vmem:[%s343] sm:$0xff]
        %v875 = vld [vmem:[%s343 + $0x8] sm:$0xff]
        %v876 = vld [vmem:[%s343 + $0x10] sm:$0xff]
        %v877 = vld [vmem:[%s343 + $0x18] sm:$0xff]
        %v878 = vld [vmem:[%s343 + $0x20] sm:$0xff]
        %v879 = vld [vmem:[%s343 + $0x28] sm:$0xff]
        %v880 = vld [vmem:[%s343 + $0x30] sm:$0xff]
        %v881 = vld [vmem:[%s343 + $0x38] sm:$0xff]
        %v882 = vld [vmem:[%s343 + $0x40] sm:$0xff]
        %v883 = vld [vmem:[%s343 + $0x48] sm:$0xff]
        %v884 = vld [vmem:[%s343 + $0x50] sm:$0xff]
        %v885 = vld [vmem:[%s343 + $0x58] sm:$0xff]
        %v886 = vld [vmem:[%s343 + $0x60] sm:$0xff]
        %v887 = vld [vmem:[%s343 + $0x68] sm:$0xff]
        %v888 = vld [vmem:[%s343 + $0x70] sm:$0xff]
        %v889 = vld [vmem:[%s343 + $0x78] sm:$0xff]
        %v890 = vld [vmem:[%s4] sm:$0xff]
        %v891 = vld [vmem:[%s4 + $0x8] sm:$0xff]
        %v892 = vld [vmem:[%s4 + $0x10] sm:$0xff]
        %v893 = vld [vmem:[%s4 + $0x18] sm:$0xff]
        %v894 = vld [vmem:[%s4 + $0x20] sm:$0xff]
        %v895 = vld [vmem:[%s4 + $0x28] sm:$0xff]
        %v896 = vld [vmem:[%s4 + $0x30] sm:$0xff]
        %v897 = vld [vmem:[%s4 + $0x38] sm:$0xff]
        %v898 = vld [vmem:[%s4 + $0x40] sm:$0xff]
        %v899 = vld [vmem:[%s4 + $0x48] sm:$0xff]
        %v900 = vld [vmem:[%s4 + $0x50] sm:$0xff]
        %v901 = vld [vmem:[%s4 + $0x58] sm:$0xff]
        %v902 = vld [vmem:[%s4 + $0x60] sm:$0xff]
        %v903 = vld [vmem:[%s4 + $0x68] sm:$0xff]
        %v904 = vld [vmem:[%s4 + $0x70] sm:$0xff]
        %v905 = vld [vmem:[%s4 + $0x78] sm:$0xff]
        %v906 = vld [vmem:[%s5] sm:$0xff]
        %v907 = vld [vmem:[%s5 + $0x8] sm:$0xff]
        %v908 = vld [vmem:[%s5 + $0x10] sm:$0xff]
        %v909 = vld [vmem:[%s5 + $0x18] sm:$0xff]
        %v910 = vld [vmem:[%s5 + $0x20] sm:$0xff]
        %v911 = vld [vmem:[%s5 + $0x28] sm:$0xff]
        %v912 = vld [vmem:[%s5 + $0x30] sm:$0xff]
        %v913 = vld [vmem:[%s5 + $0x38] sm:$0xff]
        %v914 = vld [vmem:[%s5 + $0x40] sm:$0xff]
        %v915 = vld [vmem:[%s5 + $0x48] sm:$0xff]
        %v916 = vld [vmem:[%s5 + $0x50] sm:$0xff]
        %v917 = vld [vmem:[%s5 + $0x58] sm:$0xff]
        %v918 = vld [vmem:[%s5 + $0x60] sm:$0xff]
        %v919 = vld [vmem:[%s5 + $0x68] sm:$0xff]
        %v920 = vld [vmem:[%s5 + $0x70] sm:$0xff]
        %v921 = vld [vmem:[%s5 + $0x78] sm:$0xff]
        %922 = vmatprep.subr.mxu0 0.0
        %923 = vmatpush1.msra.mxu0 %v906
        %924 = vmatprep.subr.mxu0 0.0
        %925 = vmatpush1.msra.mxu0 %v907
        %926 = vmatprep.subr.mxu0 0.0
        %927 = vmatpush1.msra.mxu0 %v908
        %928 = vmatprep.subr.mxu0 0.0
        %929 = vmatpush1.msra.mxu0 %v909
        %930 = vmatprep.subr.mxu0 0.0
        %931 = vmatpush1.msra.mxu0 %v910
        %932 = vmatprep.subr.mxu0 0.0
        %933 = vmatpush1.msra.mxu0 %v911
        %934 = vmatprep.subr.mxu0 0.0
        %935 = vmatpush1.msra.mxu0 %v912
        %936 = vmatprep.subr.mxu0 0.0
        %937 = vmatpush1.msra.mxu0 %v913
        %938 = vmatprep.subr.mxu0 0.0
        %939 = vmatpush1.msra.mxu0 %v914
        %940 = vmatprep.subr.mxu0 0.0
        %941 = vmatpush1.msra.mxu0 %v915
        %942 = vmatprep.subr.mxu0 0.0
        %943 = vmatpush1.msra.mxu0 %v916
        %944 = vmatprep.subr.mxu0 0.0
        %945 = vmatpush1.msra.mxu0 %v917
        %946 = vmatprep.subr.mxu0 0.0
        %947 = vmatpush1.msra.mxu0 %v918
        %948 = vmatprep.subr.mxu0 0.0
        %949 = vmatpush1.msra.mxu0 %v919
        %950 = vmatprep.subr.mxu0 0.0
        %951 = vmatpush1.msra.mxu0 %v920
        %952 = vmatprep.subr.mxu0 0.0
        %953 = vmatpush1.msra.mxu0 %v921
        %954 = vmatprep.subr.mxu0 0.0
        %955 = vmatpush1.msra.mxu0 0.0
        %956 = vmatprep.subr.mxu0 0.0
        %957 = vmatpush1.msra.mxu0 0.0
        %958 = vmatprep.subr.mxu0 0.0
        %959 = vmatpush1.msra.mxu0 0.0
        %960 = vmatprep.subr.mxu0 0.0
        %961 = vmatpush1.msra.mxu0 0.0
        %962 = vmatprep.subr.mxu0 0.0
        %963 = vmatpush1.msra.mxu0 0.0
        %964 = vmatprep.subr.mxu0 0.0
        %965 = vmatpush1.msra.mxu0 0.0
        %966 = vmatprep.subr.mxu0 0.0
        %967 = vmatpush1.msra.mxu0 0.0
        %968 = vmatprep.subr.mxu0 0.0
        %969 = vmatpush1.msra.mxu0 0.0
        %970 = vmatprep.subr.mxu0 0.0
        %971 = vmatpush1.msra.mxu0 0.0
        %972 = vmatprep.subr.mxu0 0.0
        %973 = vmatpush1.msra.mxu0 0.0
        %974 = vmatprep.subr.mxu0 0.0
        %975 = vmatpush1.msra.mxu0 0.0
        %976 = vmatprep.subr.mxu0 0.0
        %977 = vmatpush1.msra.mxu0 0.0
        %978 = vmatprep.subr.mxu0 0.0
        %979 = vmatpush1.msra.mxu0 0.0
        %980 = vmatprep.subr.mxu0 0.0
        %981 = vmatpush1.msra.mxu0 0.0
        %982 = vmatprep.subr.mxu0 0.0
        %983 = vmatpush1.msra.mxu0 0.0
        %984 = vmatprep.subr.mxu0 0.0
        %985 = vmatpush1.msra.mxu0 0.0
        %986 = vmatprep.mubr.f32.mxu0 0.0
        %987 = vmatmul.mubr.f32.gmra.mrb[0].mxu0 %v858
        %v988 = vpop.f32.mrb[0].mxu0
        %v989 = vadd.f32 0.0, %v988
        %v990 = vpop.f32.mrb[0].mxu0
        %991 = vmatprep.mubr.f32.mxu0 0.0
        %992 = vmatmul.mubr.f32.gmra.mrb[0].mxu0 %v859
        %v993 = vpop.f32.mrb[0].mxu0
        %v994 = vadd.f32 0.0, %v993
        %v995 = vpop.f32.mrb[0].mxu0
        %996 = vmatprep.mubr.f32.mxu0 0.0
        %997 = vmatmul.mubr.f32.gmra.mrb[0].mxu0 %v860
        %v998 = vpop.f32.mrb[0].mxu0
        %v999 = vadd.f32 0.0, %v998
        %v1000 = vpop.f32.mrb[0].mxu0
        %1001 = vmatprep.mubr.f32.mxu0 0.0
        %1002 = vmatmul.mubr.f32.gmra.mrb[0].mxu0 %v861
        %v1003 = vpop.f32.mrb[0].mxu0
        %v1004 = vadd.f32 0.0, %v1003
        %v1005 = vpop.f32.mrb[0].mxu0
        %1006 = vmatprep.mubr.f32.mxu0 0.0
        %1007 = vmatmul.mubr.f32.gmra.mrb[0].mxu0 %v862
        %v1008 = vpop.f32.mrb[0].mxu0
        %v1009 = vadd.f32 0.0, %v1008
        %v1010 = vpop.f32.mrb[0].mxu0
        %1011 = vmatprep.mubr.f32.mxu0 0.0
        %1012 = vmatmul.mubr.f32.gmra.mrb[0].mxu0 %v863
        %v1013 = vpop.f32.mrb[0].mxu0
        %v1014 = vadd.f32 0.0, %v1013
        %v1015 = vpop.f32.mrb[0].mxu0
        %1016 = vmatprep.mubr.f32.mxu0 0.0
        %1017 = vmatmul.mubr.f32.gmra.mrb[0].mxu0 %v864
        %v1018 = vpop.f32.mrb[0].mxu0
        %v1019 = vadd.f32 0.0, %v1018
        %v1020 = vpop.f32.mrb[0].mxu0
        %1021 = vmatprep.mubr.f32.mxu0 0.0
        %1022 = vmatmul.mubr.f32.gmra.mrb[0].mxu0 %v865
        %v1023 = vpop.f32.mrb[0].mxu0
        %v1024 = vadd.f32 0.0, %v1023
        %v1025 = vpop.f32.mrb[0].mxu0
        %1026 = vmatprep.mubr.f32.mxu0 0.0
        %1027 = vmatmul.mubr.f32.gmra.mrb[0].mxu0 %v866
        %v1028 = vpop.f32.mrb[0].mxu0
        %v1029 = vadd.f32 0.0, %v1028
        %v1030 = vpop.f32.mrb[0].mxu0
        %1031 = vmatprep.mubr.f32.mxu0 0.0
        %1032 = vmatmul.mubr.f32.gmra.mrb[0].mxu0 %v867
        %v1033 = vpop.f32.mrb[0].mxu0
        %v1034 = vadd.f32 0.0, %v1033
        %v1035 = vpop.f32.mrb[0].mxu0
        %1036 = vmatprep.mubr.f32.mxu0 0.0
        %1037 = vmatmul.mubr.f32.gmra.mrb[0].mxu0 %v868
        %v1038 = vpop.f32.mrb[0].mxu0
        %v1039 = vadd.f32 0.0, %v1038
        %v1040 = vpop.f32.mrb[0].mxu0
        %1041 = vmatprep.mubr.f32.mxu0 0.0
        %1042 = vmatmul.mubr.f32.gmra.mrb[0].mxu0 %v869
        %v1043 = vpop.f32.mrb[0].mxu0
        %v1044 = vadd.f32 0.0, %v1043
        %v1045 = vpop.f32.mrb[0].mxu0
        %1046 = vmatprep.mubr.f32.mxu0 0.0
        %1047 = vmatmul.mubr.f32.gmra.mrb[0].mxu0 %v870
        %v1048 = vpop.f32.mrb[0].mxu0
        %v1049 = vadd.f32 0.0, %v1048
        %v1050 = vpop.f32.mrb[0].mxu0
        %1051 = vmatprep.mubr.f32.mxu0 0.0
        %1052 = vmatmul.mubr.f32.gmra.mrb[0].mxu0 %v871
        %v1053 = vpop.f32.mrb[0].mxu0
        %v1054 = vadd.f32 0.0, %v1053
        %v1055 = vpop.f32.mrb[0].mxu0
        %1056 = vmatprep.mubr.f32.mxu0 0.0
        %1057 = vmatmul.mubr.f32.gmra.mrb[0].mxu0 %v872
        %v1058 = vpop.f32.mrb[0].mxu0
        %v1059 = vadd.f32 0.0, %v1058
        %v1060 = vpop.f32.mrb[0].mxu0
        %1061 = vmatprep.mubr.f32.mxu0 0.0
        %1062 = vmatmul.mubr.f32.gmra.mrb[0].mxu0 %v873
        %v1063 = vpop.f32.mrb[0].mxu0
        %v1064 = vadd.f32 0.0, %v1063
        %v1065 = vpop.f32.mrb[0].mxu0
        %1066 = vdwg.mxu0
        %1067 = vmatprep.subr.mxu0 0.0
        %1068 = vmatpush1.msra.mxu0 %v890
        %1069 = vmatprep.subr.mxu0 0.0
        %1070 = vmatpush1.msra.mxu0 %v891
        %1071 = vmatprep.subr.mxu0 0.0
        %1072 = vmatpush1.msra.mxu0 %v892
        %1073 = vmatprep.subr.mxu0 0.0
        %1074 = vmatpush1.msra.mxu0 %v893
        %1075 = vmatprep.subr.mxu0 0.0
        %1076 = vmatpush1.msra.mxu0 %v894
        %1077 = vmatprep.subr.mxu0 0.0
        %1078 = vmatpush1.msra.mxu0 %v895
        %1079 = vmatprep.subr.mxu0 0.0
        %1080 = vmatpush1.msra.mxu0 %v896
        %1081 = vmatprep.subr.mxu0 0.0
        %1082 = vmatpush1.msra.mxu0 %v897
        %1083 = vmatprep.subr.mxu0 0.0
        %1084 = vmatpush1.msra.mxu0 %v898
        %1085 = vmatprep.subr.mxu0 0.0
        %1086 = vmatpush1.msra.mxu0 %v899
        %1087 = vmatprep.subr.mxu0 0.0
        %1088 = vmatpush1.msra.mxu0 %v900
        %1089 = vmatprep.subr.mxu0 0.0
        %1090 = vmatpush1.msra.mxu0 %v901
        %1091 = vmatprep.subr.mxu0 0.0
        %1092 = vmatpush1.msra.mxu0 %v902
        %1093 = vmatprep.subr.mxu0 0.0
        %1094 = vmatpush1.msra.mxu0 %v903
        %1095 = vmatprep.subr.mxu0 0.0
        %1096 = vmatpush1.msra.mxu0 %v904
        %1097 = vmatprep.subr.mxu0 0.0
        %1098 = vmatpush1.msra.mxu0 %v905
        %1099 = vmatprep.subr.mxu0 0.0
        %1100 = vmatpush1.msra.mxu0 0.0
        %1101 = vmatprep.subr.mxu0 0.0
        %1102 = vmatpush1.msra.mxu0 0.0
        %1103 = vmatprep.subr.mxu0 0.0
        %1104 = vmatpush1.msra.mxu0 0.0
        %1105 = vmatprep.subr.mxu0 0.0
        %1106 = vmatpush1.msra.mxu0 0.0
        %1107 = vmatprep.subr.mxu0 0.0
        %1108 = vmatpush1.msra.mxu0 0.0
        %1109 = vmatprep.subr.mxu0 0.0
        %1110 = vmatpush1.msra.mxu0 0.0
        %1111 = vmatprep.subr.mxu0 0.0
        %1112 = vmatpush1.msra.mxu0 0.0
        %1113 = vmatprep.subr.mxu0 0.0
        %1114 = vmatpush1.msra.mxu0 0.0
        %1115 = vmatprep.subr.mxu0 0.0
        %1116 = vmatpush1.msra.mxu0 0.0
        %1117 = vmatprep.subr.mxu0 0.0
        %1118 = vmatpush1.msra.mxu0 0.0
        %1119 = vmatprep.subr.mxu0 0.0
        %1120 = vmatpush1.msra.mxu0 0.0
        %1121 = vmatprep.subr.mxu0 0.0
        %1122 = vmatpush1.msra.mxu0 0.0
        %1123 = vmatprep.subr.mxu0 0.0
        %1124 = vmatpush1.msra.mxu0 0.0
        %1125 = vmatprep.subr.mxu0 0.0
        %1126 = vmatpush1.msra.mxu0 0.0
        %1127 = vmatprep.subr.mxu0 0.0
        %1128 = vmatpush1.msra.mxu0 0.0
        %1129 = vmatprep.subr.mxu0 0.0
        %1130 = vmatpush1.msra.mxu0 0.0
        %1131 = vmatprep.mubr.f32.mxu0 0.0
        %1132 = vmatmul.mubr.f32.gmra.mrb[0].mxu0 %v874
        %v1133 = vpop.f32.mrb[0].mxu0
        %v1134 = vadd.f32 %v989, %v1133
        %v1135 = vpop.f32.mrb[0].mxu0
        %1136 = vmatprep.mubr.f32.mxu0 0.0
        %1137 = vmatmul.mubr.f32.gmra.mrb[0].mxu0 %v875
        %v1138 = vpop.f32.mrb[0].mxu0
        %v1139 = vadd.f32 %v994, %v1138
        %v1140 = vpop.f32.mrb[0].mxu0
        %1141 = vmatprep.mubr.f32.mxu0 0.0
        %1142 = vmatmul.mubr.f32.gmra.mrb[0].mxu0 %v876
        %v1143 = vpop.f32.mrb[0].mxu0
        %v1144 = vadd.f32 %v999, %v1143
        %v1145 = vpop.f32.mrb[0].mxu0
        %1146 = vmatprep.mubr.f32.mxu0 0.0
        %1147 = vmatmul.mubr.f32.gmra.mrb[0].mxu0 %v877
        %v1148 = vpop.f32.mrb[0].mxu0
        %v1149 = vadd.f32 %v1004, %v1148
        %v1150 = vpop.f32.mrb[0].mxu0
        %1151 = vmatprep.mubr.f32.mxu0 0.0
        %1152 = vmatmul.mubr.f32.gmra.mrb[0].mxu0 %v878
        %v1153 = vpop.f32.mrb[0].mxu0
        %v1154 = vadd.f32 %v1009, %v1153
        %v1155 = vpop.f32.mrb[0].mxu0
        %1156 = vmatprep.mubr.f32.mxu0 0.0
        %1157 = vmatmul.mubr.f32.gmra.mrb[0].mxu0 %v879
        %v1158 = vpop.f32.mrb[0].mxu0
        %v1159 = vadd.f32 %v1014, %v1158
        %v1160 = vpop.f32.mrb[0].mxu0
        %1161 = vmatprep.mubr.f32.mxu0 0.0
        %1162 = vmatmul.mubr.f32.gmra.mrb[0].mxu0 %v880
        %v1163 = vpop.f32.mrb[0].mxu0
        %v1164 = vadd.f32 %v1019, %v1163
        %v1165 = vpop.f32.mrb[0].mxu0
        %1166 = vmatprep.mubr.f32.mxu0 0.0
        %1167 = vmatmul.mubr.f32.gmra.mrb[0].mxu0 %v881
        %v1168 = vpop.f32.mrb[0].mxu0
        %v1169 = vadd.f32 %v1024, %v1168
        %v1170 = vpop.f32.mrb[0].mxu0
        %1171 = vmatprep.mubr.f32.mxu0 0.0
        %1172 = vmatmul.mubr.f32.gmra.mrb[0].mxu0 %v882
        %v1173 = vpop.f32.mrb[0].mxu0
        %v1174 = vadd.f32 %v1029, %v1173
        %v1175 = vpop.f32.mrb[0].mxu0
        %1176 = vmatprep.mubr.f32.mxu0 0.0
        %1177 = vmatmul.mubr.f32.gmra.mrb[0].mxu0 %v883
        %v1178 = vpop.f32.mrb[0].mxu0
        %v1179 = vadd.f32 %v1034, %v1178
        %v1180 = vpop.f32.mrb[0].mxu0
        %1181 = vmatprep.mubr.f32.mxu0 0.0
        %1182 = vmatmul.mubr.f32.gmra.mrb[0].mxu0 %v884
        %v1183 = vpop.f32.mrb[0].mxu0
        %v1184 = vadd.f32 %v1039, %v1183
        %v1185 = vpop.f32.mrb[0].mxu0
        %1186 = vmatprep.mubr.f32.mxu0 0.0
        %1187 = vmatmul.mubr.f32.gmra.mrb[0].mxu0 %v885
        %v1188 = vpop.f32.mrb[0].mxu0
        %v1189 = vadd.f32 %v1044, %v1188
        %v1190 = vpop.f32.mrb[0].mxu0
        %1191 = vmatprep.mubr.f32.mxu0 0.0
        %1192 = vmatmul.mubr.f32.gmra.mrb[0].mxu0 %v886
        %v1193 = vpop.f32.mrb[0].mxu0
        %v1194 = vadd.f32 %v1049, %v1193
        %v1195 = vpop.f32.mrb[0].mxu0
        %1196 = vmatprep.mubr.f32.mxu0 0.0
        %1197 = vmatmul.mubr.f32.gmra.mrb[0].mxu0 %v887
        %v1198 = vpop.f32.mrb[0].mxu0
        %v1199 = vadd.f32 %v1054, %v1198
        %v1200 = vpop.f32.mrb[0].mxu0
        %1201 = vmatprep.mubr.f32.mxu0 0.0
        %1202 = vmatmul.mubr.f32.gmra.mrb[0].mxu0 %v888
        %v1203 = vpop.f32.mrb[0].mxu0
        %v1204 = vadd.f32 %v1059, %v1203
        %v1205 = vpop.f32.mrb[0].mxu0
        %1206 = vmatprep.mubr.f32.mxu0 0.0
        %1207 = vmatmul.mubr.f32.gmra.mrb[0].mxu0 %v889
        %v1208 = vpop.f32.mrb[0].mxu0
        %v1209 = vadd.f32 %v1064, %v1208
        %v1210 = vpop.f32.mrb[0].mxu0
        %1211 = vdwg.mxu0
        %v1212 = vld [vmem:[%s6] sm:$0x1]
        %v1214 = vlaneseq
        %v1215 = vshrl.u32 %v1214, 7
        %v1216 = vsub.s32 0, %v1215
        %v1217 = vrot.slane %v1212, %v1216
        %v1219 = vadd.f32 %v1134, %v1217
        %v1220 = vadd.f32 %v1139, %v1217
        %v1221 = vadd.f32 %v1144, %v1217
        %v1222 = vadd.f32 %v1149, %v1217
        %v1223 = vadd.f32 %v1154, %v1217
        %v1224 = vadd.f32 %v1159, %v1217
        %v1225 = vadd.f32 %v1164, %v1217
        %v1226 = vadd.f32 %v1169, %v1217
        %v1227 = vadd.f32 %v1174, %v1217
        %v1228 = vadd.f32 %v1179, %v1217
        %v1229 = vadd.f32 %v1184, %v1217
        %v1230 = vadd.f32 %v1189, %v1217
        %v1231 = vadd.f32 %v1194, %v1217
        %v1232 = vadd.f32 %v1199, %v1217
        %v1233 = vadd.f32 %v1204, %v1217
        %v1234 = vadd.f32 %v1209, %v1217
        %v1235 = vmax.f32 %v1219, 0.0
        %v1236 = vmax.f32 %v1220, 0.0
        %v1237 = vmax.f32 %v1221, 0.0
        %v1238 = vmax.f32 %v1222, 0.0
        %v1239 = vmax.f32 %v1223, 0.0
        %v1240 = vmax.f32 %v1224, 0.0
        %v1241 = vmax.f32 %v1225, 0.0
        %v1242 = vmax.f32 %v1226, 0.0
        %v1243 = vmax.f32 %v1227, 0.0
        %v1244 = vmax.f32 %v1228, 0.0
        %v1245 = vmax.f32 %v1229, 0.0
        %v1246 = vmax.f32 %v1230, 0.0
        %v1247 = vmax.f32 %v1231, 0.0
        %v1248 = vmax.f32 %v1232, 0.0
        %v1249 = vmax.f32 %v1233, 0.0
        %v1250 = vmax.f32 %v1234, 0.0
        %1251 = vst [vmem:[%s355] sm:$0xff] %v1235
        %1252 = vst [vmem:[%s355 + $0x8] sm:$0xff] %v1236
        %1253 = vst [vmem:[%s355 + $0x10] sm:$0xff] %v1237
        %1254 = vst [vmem:[%s355 + $0x18] sm:$0xff] %v1238
        %1255 = vst [vmem:[%s355 + $0x20] sm:$0xff] %v1239
        %1256 = vst [vmem:[%s355 + $0x28] sm:$0xff] %v1240
        %1257 = vst [vmem:[%s355 + $0x30] sm:$0xff] %v1241
        %1258 = vst [vmem:[%s355 + $0x38] sm:$0xff] %v1242
        %1259 = vst [vmem:[%s355 + $0x40] sm:$0xff] %v1243
        %1260 = vst [vmem:[%s355 + $0x48] sm:$0xff] %v1244
        %1261 = vst [vmem:[%s355 + $0x50] sm:$0xff] %v1245
        %1262 = vst [vmem:[%s355 + $0x58] sm:$0xff] %v1246
        %1263 = vst [vmem:[%s355 + $0x60] sm:$0xff] %v1247
        %1264 = vst [vmem:[%s355 + $0x68] sm:$0xff] %v1248
        %1265 = vst [vmem:[%s355 + $0x70] sm:$0xff] %v1249
        %1266 = vst [vmem:[%s355 + $0x78] sm:$0xff] %v1250
      $region56: #{sage_forward.5} parent=47 // pred_fallthru
        _
      %s1267 = smul.u32 16, %s22
      %p1268 = scmp.lt.s32.totalorder %s1267, 15
      %s1269 = scalar_select %p1268, %s1267, 15
      %s1270 = smul.addr %s1269, 8
      %s1271 = scalar_lea.vmem %s7, %s1270
      // Predicated region
      $region57: #{sage_forward.5} parent=47 // pred_check
        %p1272 = pneg %p215
      $region58: #{sage_forward.5} parent=47 // pred_check_branch
        %1274 = sbr.rel (%p1272) target = $region60
      $region59: #{sage_forward.5} parent=47 // pred_region
        %s1275 = smul.u32 16, %s22
      $region60: #{sage_forward.5} parent=47 // pred_fallthru
        _
      // Predicated region
      $region61: #{sage_forward.5} parent=47 // pred_check
        %p1276 = pneg %p215
      $region62: #{sage_forward.5} parent=47 // pred_check_branch
        %1278 = sbr.rel (%p1276) target = $region64
      $region63: #{sage_forward.5} parent=47 // pred_region
        %s1279 = smul.u32 16, %s22
        %p1280 = scmp.lt.s32.totalorder %s1279, 15
        %s1281 = scalar_select %p1280, %s1279, 15
        %s1282 = smul.addr %s1281, 8
        %s1283 = scalar_lea.vmem %s7, %s1282
      $region64: #{sage_forward.5} parent=47 // pred_fallthru
        _
    $region48: #{sage_forward.5} parent=5 // pred_fallthru
      _
    %p1284 = scmp.le.s32.totalorder 2, %s13
    // Predicated region
    $region65: #{sage_forward.5} parent=5 // pred_check
      %p1285 = pneg %p1284
    $region66: #{sage_forward.5} parent=5 // pred_check_branch
      %1287 = sbr.rel (%p1285) target = $region68
    $region67: #{sage_forward.5} parent=5 // pred_region
      %s1288 = ssub.s32 %s13, 2
    $region68: #{sage_forward.5} parent=5 // pred_fallthru
      _
  $region6: #{sage_forward.5} parent=0 // loop_footer
    %s17 = sadd.s32 1, %s13
  $region7: #{sage_forward.5} parent=0 // loop_footer_branch
    %12 = sbr.rel target = $region3
  $region8: #{sage_forward.5} parent=0 // loop_exit
    _

</llo_original>
